<compile_context>
chip_gen: v5e
topology: v5e:2x2
jax: 0.10.0
libtpu: 0.0.40
codegen_flags: <defaults>
</compile_context>

<pallas_src>
import functools

import jax
import jax.numpy as jnp
from jax.experimental import pallas as pl
from jax.experimental.pallas import tpu as pltpu

# Layer sizes exactly as in the PyTorch module.
DIMS = (784, 512, 256, 128, 64, 10)
LANE = 128
SUB = 16            # bf16 native sublane tile height
OUT_PAD = LANE      # logits lane-padded 10 -> 128 for a lane-dense output block


def _round_up(n, m):
    return (n + m - 1) // m * m


def _mlp_kernel(x_ref,
                w1_ref, b1_ref,
                w2_ref, b2_ref,
                w3_ref, b3_ref,
                w4_ref, b4_ref,
                w5_ref, b5_ref,
                out_ref):
    """Fused 5-layer MLP forward for one batch tile; all operands resident in VMEM."""

    def layer(h, w_ref, b_ref):
        # bf16 x bf16 -> f32 accumulate on the MXU, bias add + ReLU on the VPU,
        # cast back to bf16 so the next matmul is single-pass.
        a = jnp.dot(h, w_ref[...], preferred_element_type=jnp.float32) + b_ref[...]
        return jnp.maximum(a, 0.0).astype(jnp.bfloat16)

    h = x_ref[...]                       # bf16 (tile, 784) -- no K padding
    h = layer(h, w1_ref, b1_ref)         # (tile, 512)
    h = layer(h, w2_ref, b2_ref)         # (tile, 256)
    h = layer(h, w3_ref, b3_ref)         # (tile, 128)
    h = layer(h, w4_ref, b4_ref)         # (tile, 64)  -- real width, no dead columns

    # layer5: Linear only (logits). w5/b5 are lane-padded to 128 cols so this store is
    # a full-width, unmasked vst; padded cols 10.. are exact zeros.
    logits = jnp.dot(h, w5_ref[...], preferred_element_type=jnp.float32) + b5_ref[...]
    out_ref[...] = logits.astype(out_ref.dtype)   # bf16, lane-dense (tile, 128)


def prepare_params(params):
    """One-time packing (hoisted out of the per-call path): bf16 weights stored as
    (in, out) == W_pytorch.T, f32 biases (1, out). Only the final 10-wide layer is
    lane-padded to 128 columns."""
    packed = []
    last = len(params) - 1
    for i, (w, b) in enumerate(params):
        if i == last:
            w = jnp.pad(w, ((0, 0), (0, OUT_PAD - w.shape[1])))
            b = jnp.pad(b, ((0, 0), (0, OUT_PAD - b.shape[1])))
        packed.append((w.astype(jnp.bfloat16), b.astype(jnp.float32)))
    return packed


@functools.partial(jax.jit, static_argnames=("batch_tile",))
def net_forward(x, packed_params, batch_tile=1024):
    """Pallas forward pass. x: (B, 1, 28, 28) or anything flattening to (B, 784).
    packed_params: output of prepare_params()."""
    assert batch_tile % SUB == 0, "batch_tile must be a multiple of 16 (bf16 sublane tile)"

    x2d = x.reshape(-1, DIMS[0])                     # == x.view(-1, 784)
    B = x2d.shape[0]

    # Tile sizing: clamp to the (16-rounded) batch, then cap so the grid keeps >=2
    # steps when possible (lets dimension_semantics=("parallel",) engage both v7x TCs).
    B16 = _round_up(B, SUB)
    tile = min(batch_tile, B16)
    if B16 >= 2 * SUB and tile > B16 // 2:
        tile = max(SUB, (B16 // 2) // SUB * SUB)
    B_pad = _round_up(B, tile)

    # Pad only batch rows (sliced off below); stream the input as bf16 with its real
    # 784-wide feature dim (full-array last dim => legal block, no 896 pad round-trip).
    xp = jnp.pad(x2d, ((0, B_pad - B), (0, 0))).astype(jnp.bfloat16)

    operands = [xp]
    in_specs = [pl.BlockSpec((tile, DIMS[0]), lambda i: (i, 0))]

    def resident(arr):
        # Grid-invariant full-array block: weights/biases (~1.2 MiB bf16) stay in VMEM.
        return pl.BlockSpec(arr.shape, lambda i: (0, 0))

    for w, b in packed_params:
        operands += [w, b]
        in_specs += [resident(w), resident(b)]

    out = pl.pallas_call(
        _mlp_kernel,
        out_shape=jax.ShapeDtypeStruct((B_pad, OUT_PAD), jnp.bfloat16),
        grid=(B_pad // tile,),
        in_specs=in_specs,
        out_specs=pl.BlockSpec((tile, OUT_PAD), lambda i: (i, 0)),
        compiler_params=pltpu.CompilerParams(
            dimension_semantics=("parallel",)),
    )(*operands)

    # Drop batch padding and the lane padding of the 10-wide logits; f32 for callers.
    return out[:B, :DIMS[-1]].astype(jnp.float32)


def init_params(key):
    """PyTorch-style init: U(-1/sqrt(fan_in), 1/sqrt(fan_in)).
    Weights stored as (in, out) == W_pytorch.T so the kernel computes h @ W."""
    params = []
    for fan_in, fan_out in zip(DIMS[:-1], DIMS[1:]):
        key, kw, kb = jax.random.split(key, 3)
        bound = 1.0 / jnp.sqrt(fan_in)
        w = jax.random.uniform(kw, (fan_in, fan_out), jnp.float32, -bound, bound)
        b = jax.random.uniform(kb, (1, fan_out), jnp.float32, -bound, bound)
        params.append((w, b))
    return params


def reference_forward(x, params):
    """Plain-JAX reference with the same bf16-weight / f32-accumulate semantics."""
    h = x.reshape(-1, DIMS[0]).astype(jnp.bfloat16)
    out = None
    for i, (w, b) in enumerate(params):
        a = jnp.dot(h, w.astype(jnp.bfloat16),
                    preferred_element_type=jnp.float32) + b
        if i < len(params) - 1:
            h = jnp.maximum(a, 0.0).astype(jnp.bfloat16)
        else:
            out = a
    return out


if __name__ == "__main__":
    key = jax.random.PRNGKey(0)
    kp, kx1, kx2 = jax.random.split(key, 3)

    params = init_params(kp)
    packed = prepare_params(params)   # one-time pack (bf16 weights, padded logits layer)

    # MNIST-shaped synthetic input, NCHW like the PyTorch DataLoader would supply.
    x = jax.random.normal(kx1, (8, 1, 28, 28), jnp.float32)
    out = jax.block_until_ready(net_forward(x, packed))
    ref = reference_forward(x, params)
    assert out.shape == (8, 10)
    assert jnp.allclose(out, ref, atol=3e-2, rtol=3e-2), "mismatch vs reference (B=8)"

    # Exercise a multi-step grid (tile gets capped to 16 -> 3 grid steps).
    x2 = jax.random.normal(kx2, (48, 1, 28, 28), jnp.float32)
    out2 = jax.block_until_ready(net_forward(x2, packed, batch_tile=32))
    ref2 = reference_forward(x2, params)
    assert out2.shape == (48, 10)
    assert jnp.allclose(out2, ref2, atol=3e-2, rtol=3e-2), "mismatch vs reference (B=48)"

    print("KERNEL_OK")
</pallas_src>

<mosaic_0001>
module attributes {stable_mosaic.version = 11 : i64} {
  func.func @_mlp_kernel(%arg0: i32, %arg1: memref<16x784xbf16, #tpu.memory_space<vmem>>, %arg2: memref<784x512xbf16, #tpu.memory_space<vmem>>, %arg3: memref<1x512xf32, #tpu.memory_space<vmem>>, %arg4: memref<512x256xbf16, #tpu.memory_space<vmem>>, %arg5: memref<1x256xf32, #tpu.memory_space<vmem>>, %arg6: memref<256x128xbf16, #tpu.memory_space<vmem>>, %arg7: memref<1x128xf32, #tpu.memory_space<vmem>>, %arg8: memref<128x64xbf16, #tpu.memory_space<vmem>>, %arg9: memref<1x64xf32, #tpu.memory_space<vmem>>, %arg10: memref<64x128xbf16, #tpu.memory_space<vmem>>, %arg11: memref<1x128xf32, #tpu.memory_space<vmem>>, %arg12: memref<16x128xbf16, #tpu.memory_space<vmem>>) attributes {dimension_semantics = [#tpu.dimension_semantics<parallel>], iteration_bounds = array<i64: 1>, scalar_prefetch = 0 : i64, scratch_operands = 0 : i64, tpu.core_type = #tpu.core_type<tc>, window_params = [{transform_indices = @transform_0, window_bounds = array<i64: 16, 784>}, {pipeline_mode = #tpu.pipeline_mode<synchronous>, transform_indices = @transform_1, window_bounds = array<i64: 784, 512>}, {pipeline_mode = #tpu.pipeline_mode<synchronous>, transform_indices = @transform_2, window_bounds = array<i64: 1, 512>}, {pipeline_mode = #tpu.pipeline_mode<synchronous>, transform_indices = @transform_3, window_bounds = array<i64: 512, 256>}, {pipeline_mode = #tpu.pipeline_mode<synchronous>, transform_indices = @transform_4, window_bounds = array<i64: 1, 256>}, {pipeline_mode = #tpu.pipeline_mode<synchronous>, transform_indices = @transform_5, window_bounds = array<i64: 256, 128>}, {pipeline_mode = #tpu.pipeline_mode<synchronous>, transform_indices = @transform_6, window_bounds = array<i64: 1, 128>}, {pipeline_mode = #tpu.pipeline_mode<synchronous>, transform_indices = @transform_7, window_bounds = array<i64: 128, 64>}, {pipeline_mode = #tpu.pipeline_mode<synchronous>, transform_indices = @transform_8, window_bounds = array<i64: 1, 64>}, {pipeline_mode = #tpu.pipeline_mode<synchronous>, transform_indices = @transform_9, window_bounds = array<i64: 64, 128>}, {pipeline_mode = #tpu.pipeline_mode<synchronous>, transform_indices = @transform_10, window_bounds = array<i64: 1, 128>}, {transform_indices = @transform_11, window_bounds = array<i64: 16, 128>}]} {
    %c0 = arith.constant 0 : index
    %c0_0 = arith.constant 0 : index
    %0 = vector.load %arg1[%c0, %c0_0] : memref<16x784xbf16, #tpu.memory_space<vmem>>, vector<16x784xbf16>
    %c0_1 = arith.constant 0 : index
    %c0_2 = arith.constant 0 : index
    %1 = vector.load %arg2[%c0_1, %c0_2] : memref<784x512xbf16, #tpu.memory_space<vmem>>, vector<784x512xbf16>
    %cst = arith.constant dense<0.000000e+00> : vector<16x512xf32>
    %2 = tpu.matmul %0, %1, %cst {dimension_numbers = #tpu.dot_dimension_numbers<[1], [0], [0], [1], [0, 0, 1, 1], [], []>} : vector<16x784xbf16>, vector<784x512xbf16>, vector<16x512xf32> -> vector<16x512xf32>
    %c0_3 = arith.constant 0 : index
    %c0_4 = arith.constant 0 : index
    %3 = vector.load %arg3[%c0_3, %c0_4] : memref<1x512xf32, #tpu.memory_space<vmem>>, vector<1x512xf32>
    %4 = vector.broadcast %3 : vector<1x512xf32> to vector<16x512xf32>
    %5 = arith.addf %2, %4 : vector<16x512xf32>
    %cst_5 = arith.constant 0.000000e+00 : f32
    %6 = vector.broadcast %cst_5 : f32 to vector<16x512xf32>
    %7 = arith.maximumf %5, %6 : vector<16x512xf32>
    %8 = arith.truncf %7 : vector<16x512xf32> to vector<16x512xbf16>
    %c0_6 = arith.constant 0 : index
    %c0_7 = arith.constant 0 : index
    %9 = vector.load %arg4[%c0_6, %c0_7] : memref<512x256xbf16, #tpu.memory_space<vmem>>, vector<512x256xbf16>
    %cst_8 = arith.constant dense<0.000000e+00> : vector<16x256xf32>
    %10 = tpu.matmul %8, %9, %cst_8 {dimension_numbers = #tpu.dot_dimension_numbers<[1], [0], [0], [1], [0, 0, 1, 1], [], []>} : vector<16x512xbf16>, vector<512x256xbf16>, vector<16x256xf32> -> vector<16x256xf32>
    %c0_9 = arith.constant 0 : index
    %c0_10 = arith.constant 0 : index
    %11 = vector.load %arg5[%c0_9, %c0_10] : memref<1x256xf32, #tpu.memory_space<vmem>>, vector<1x256xf32>
    %12 = vector.broadcast %11 : vector<1x256xf32> to vector<16x256xf32>
    %13 = arith.addf %10, %12 : vector<16x256xf32>
    %cst_11 = arith.constant 0.000000e+00 : f32
    %14 = vector.broadcast %cst_11 : f32 to vector<16x256xf32>
    %15 = arith.maximumf %13, %14 : vector<16x256xf32>
    %16 = arith.truncf %15 : vector<16x256xf32> to vector<16x256xbf16>
    %c0_12 = arith.constant 0 : index
    %c0_13 = arith.constant 0 : index
    %17 = vector.load %arg6[%c0_12, %c0_13] : memref<256x128xbf16, #tpu.memory_space<vmem>>, vector<256x128xbf16>
    %cst_14 = arith.constant dense<0.000000e+00> : vector<16x128xf32>
    %18 = tpu.matmul %16, %17, %cst_14 {dimension_numbers = #tpu.dot_dimension_numbers<[1], [0], [0], [1], [0, 0, 1, 1], [], []>} : vector<16x256xbf16>, vector<256x128xbf16>, vector<16x128xf32> -> vector<16x128xf32>
    %c0_15 = arith.constant 0 : index
    %c0_16 = arith.constant 0 : index
    %19 = vector.load %arg7[%c0_15, %c0_16] : memref<1x128xf32, #tpu.memory_space<vmem>>, vector<1x128xf32>
    %20 = vector.broadcast %19 : vector<1x128xf32> to vector<16x128xf32>
    %21 = arith.addf %18, %20 : vector<16x128xf32>
    %cst_17 = arith.constant 0.000000e+00 : f32
    %22 = vector.broadcast %cst_17 : f32 to vector<16x128xf32>
    %23 = arith.maximumf %21, %22 : vector<16x128xf32>
    %24 = arith.truncf %23 : vector<16x128xf32> to vector<16x128xbf16>
    %c0_18 = arith.constant 0 : index
    %c0_19 = arith.constant 0 : index
    %25 = vector.load %arg8[%c0_18, %c0_19] : memref<128x64xbf16, #tpu.memory_space<vmem>>, vector<128x64xbf16>
    %cst_20 = arith.constant dense<0.000000e+00> : vector<16x64xf32>
    %26 = tpu.matmul %24, %25, %cst_20 {dimension_numbers = #tpu.dot_dimension_numbers<[1], [0], [0], [1], [0, 0, 1, 1], [], []>} : vector<16x128xbf16>, vector<128x64xbf16>, vector<16x64xf32> -> vector<16x64xf32>
    %c0_21 = arith.constant 0 : index
    %c0_22 = arith.constant 0 : index
    %27 = vector.load %arg9[%c0_21, %c0_22] : memref<1x64xf32, #tpu.memory_space<vmem>>, vector<1x64xf32>
    %28 = vector.broadcast %27 : vector<1x64xf32> to vector<16x64xf32>
    %29 = arith.addf %26, %28 : vector<16x64xf32>
    %cst_23 = arith.constant 0.000000e+00 : f32
    %30 = vector.broadcast %cst_23 : f32 to vector<16x64xf32>
    %31 = arith.maximumf %29, %30 : vector<16x64xf32>
    %32 = arith.truncf %31 : vector<16x64xf32> to vector<16x64xbf16>
    %c0_24 = arith.constant 0 : index
    %c0_25 = arith.constant 0 : index
    %33 = vector.load %arg10[%c0_24, %c0_25] : memref<64x128xbf16, #tpu.memory_space<vmem>>, vector<64x128xbf16>
    %cst_26 = arith.constant dense<0.000000e+00> : vector<16x128xf32>
    %34 = tpu.matmul %32, %33, %cst_26 {dimension_numbers = #tpu.dot_dimension_numbers<[1], [0], [0], [1], [0, 0, 1, 1], [], []>} : vector<16x64xbf16>, vector<64x128xbf16>, vector<16x128xf32> -> vector<16x128xf32>
    %c0_27 = arith.constant 0 : index
    %c0_28 = arith.constant 0 : index
    %35 = vector.load %arg11[%c0_27, %c0_28] : memref<1x128xf32, #tpu.memory_space<vmem>>, vector<1x128xf32>
    %36 = vector.broadcast %35 : vector<1x128xf32> to vector<16x128xf32>
    %37 = arith.addf %34, %36 : vector<16x128xf32>
    %38 = arith.truncf %37 : vector<16x128xf32> to vector<16x128xbf16>
    %c0_29 = arith.constant 0 : index
    %c0_30 = arith.constant 0 : index
    %39 = vector.load %arg12[%c0_29, %c0_30] : memref<16x128xbf16, #tpu.memory_space<vmem>>, vector<16x128xbf16>
    tpu.vector_store %arg12[%c0_29, %c0_30], %38 {strides = array<i32>} : memref<16x128xbf16, #tpu.memory_space<vmem>>, vector<16x128xbf16>,
    return
  }
  func.func @transform_0(%arg0: i32) -> (i32, i32) {
    %c0_i32 = arith.constant 0 : i32
    %c0_i32_0 = arith.constant 0 : i32
    return %arg0, %c0_i32 : i32, i32
  }
  func.func @transform_1(%arg0: i32) -> (i32, i32) {
    %c0_i32 = arith.constant 0 : i32
    %c0_i32_0 = arith.constant 0 : i32
    %c0_i32_1 = arith.constant 0 : i32
    return %c0_i32, %c0_i32_0 : i32, i32
  }
  func.func @transform_2(%arg0: i32) -> (i32, i32) {
    %c0_i32 = arith.constant 0 : i32
    %c0_i32_0 = arith.constant 0 : i32
    %c0_i32_1 = arith.constant 0 : i32
    return %c0_i32, %c0_i32_0 : i32, i32
  }
  func.func @transform_3(%arg0: i32) -> (i32, i32) {
    %c0_i32 = arith.constant 0 : i32
    %c0_i32_0 = arith.constant 0 : i32
    %c0_i32_1 = arith.constant 0 : i32
    return %c0_i32, %c0_i32_0 : i32, i32
  }
  func.func @transform_4(%arg0: i32) -> (i32, i32) {
    %c0_i32 = arith.constant 0 : i32
    %c0_i32_0 = arith.constant 0 : i32
    %c0_i32_1 = arith.constant 0 : i32
    return %c0_i32, %c0_i32_0 : i32, i32
  }
  func.func @transform_5(%arg0: i32) -> (i32, i32) {
    %c0_i32 = arith.constant 0 : i32
    %c0_i32_0 = arith.constant 0 : i32
    %c0_i32_1 = arith.constant 0 : i32
    return %c0_i32, %c0_i32_0 : i32, i32
  }
  func.func @transform_6(%arg0: i32) -> (i32, i32) {
    %c0_i32 = arith.constant 0 : i32
    %c0_i32_0 = arith.constant 0 : i32
    %c0_i32_1 = arith.constant 0 : i32
    return %c0_i32, %c0_i32_0 : i32, i32
  }
  func.func @transform_7(%arg0: i32) -> (i32, i32) {
    %c0_i32 = arith.constant 0 : i32
    %c0_i32_0 = arith.constant 0 : i32
    %c0_i32_1 = arith.constant 0 : i32
    return %c0_i32, %c0_i32_0 : i32, i32
  }
  func.func @transform_8(%arg0: i32) -> (i32, i32) {
    %c0_i32 = arith.constant 0 : i32
    %c0_i32_0 = arith.constant 0 : i32
    %c0_i32_1 = arith.constant 0 : i32
    return %c0_i32, %c0_i32_0 : i32, i32
  }
  func.func @transform_9(%arg0: i32) -> (i32, i32) {
    %c0_i32 = arith.constant 0 : i32
    %c0_i32_0 = arith.constant 0 : i32
    %c0_i32_1 = arith.constant 0 : i32
    return %c0_i32, %c0_i32_0 : i32, i32
  }
  func.func @transform_10(%arg0: i32) -> (i32, i32) {
    %c0_i32 = arith.constant 0 : i32
    %c0_i32_0 = arith.constant 0 : i32
    %c0_i32_1 = arith.constant 0 : i32
    return %c0_i32, %c0_i32_0 : i32, i32
  }
  func.func @transform_11(%arg0: i32) -> (i32, i32) {
    %c0_i32 = arith.constant 0 : i32
    %c0_i32_0 = arith.constant 0 : i32
    return %arg0, %c0_i32 : i32, i32
  }
}

</mosaic_0001>

<llo_original>
// kernel: net_forward.1
$region0: #{net_forward.1}
  #allocation0 [shape = 'u32[]', space=smem, size = 0x4, offset = 0x4, fixed_abs, tag = 'smem constant byte address 0x4 - core index']
  #allocation1 [shape = 'u32[72,128]{1,0:T(1,128)}', space=vmem, size = 0x9000, scoped, tag = 'internal scratch']
  %s0 = inlined_call_operand.vmem [shape: bf16[16,784], index: 0, kind: input, shape index: {}]
  %s1 = inlined_call_operand.hbm [shape: bf16[784,512], index: 1, kind: input, shape index: {}]
  %s2 = inlined_call_operand.vmem [shape: f32[1,512], index: 2, kind: input, shape index: {}]
  %s3 = inlined_call_operand.vmem [shape: bf16[512,256], index: 3, kind: input, shape index: {}]
  %s4 = inlined_call_operand.vmem [shape: f32[1,256], index: 4, kind: input, shape index: {}]
  %s5 = inlined_call_operand.vmem [shape: bf16[256,128], index: 5, kind: input, shape index: {}]
  %s6 = inlined_call_operand.vmem [shape: f32[1,128], index: 6, kind: input, shape index: {}]
  %s7 = inlined_call_operand.vmem [shape: bf16[128,64], index: 7, kind: input, shape index: {}]
  %s8 = inlined_call_operand.vmem [shape: f32[1,64], index: 8, kind: input, shape index: {}]
  %s9 = inlined_call_operand.hbm [shape: bf16[64,128], index: 9, kind: input, shape index: {}]
  %s10 = inlined_call_operand.vmem [shape: f32[1,128], index: 10, kind: input, shape index: {}]
  %s11 = inlined_call_operand.vmem [shape: bf16[16,128], index: 11, kind: output, shape index: {}]
  %s12 = sld [smem:[#allocation0]]
  $region62: #{net_forward.1} parent=0
    _
  %s14 = ssub.s32 1, %s12
  %s15 = scalar_select 0, %s14, %s12
  $region1: #{net_forward.1} parent=0
    #allocation2 [shape = 'u8[802816]{0}', space=vmem, size = 0xc4000, scoped, tag = 'input window, operand 1, single buffered']
    #allocation3 [shape = 's32[1]{0}', space=sflag, size = 0x4, scoped, tag = 'scoped memory for net_forward.1']
    #allocation4 [shape = 'u8[16384]{0}', space=vmem, size = 0x4000, scoped, tag = 'input window, operand 9, single buffered']
    #allocation5 [shape = 's32[1]{0}', space=sflag, size = 0x4, scoped, tag = 'scoped memory for net_forward.1']
    %16 = vsyncpa [#allocation3], 0
    %17 = vsyncpa [#allocation5], 0
    // Predicated region
    $region2: #{net_forward.1} parent=1 // pred_check
      _
    $region3: #{net_forward.1} parent=1 // pred_check_branch
      %19 = sbr.rel (0) target = $region5
    $region4: #{net_forward.1} parent=1 // pred_region
      _
    $region5: #{net_forward.1} parent=1 // pred_fallthru
      _
    // Predicated region
    $region6: #{net_forward.1} parent=1 // pred_check
      _
    $region7: #{net_forward.1} parent=1 // pred_check_branch
      %21 = sbr.rel (0) target = $region9
    $region8: #{net_forward.1} parent=1 // pred_region
      %23 = vsyncadd [#allocation3], 0
      %s24 = sshll.u32 %s1, 4
      %s25 = int_to_ptr.hbm [resolvable:$true] %s24
      %s26 = sshll.u32 [#allocation2], 4
      %s27 = int_to_ptr.vmem [resolvable:$true] %s26
      %32 = dma.hbm_to_vmem [thread:$0]  %s25, 25088, %s27, [#allocation3], 256, 256, 16
    $region9: #{net_forward.1} parent=1 // pred_fallthru
      _
    // Predicated region
    $region10: #{net_forward.1} parent=1 // pred_check
      _
    $region11: #{net_forward.1} parent=1 // pred_check_branch
      %34 = sbr.rel (0) target = $region13
    $region12: #{net_forward.1} parent=1 // pred_region
      _
    $region13: #{net_forward.1} parent=1 // pred_fallthru
      _
    // Predicated region
    $region14: #{net_forward.1} parent=1 // pred_check
      _
    $region15: #{net_forward.1} parent=1 // pred_check_branch
      %36 = sbr.rel (0) target = $region17
    $region16: #{net_forward.1} parent=1 // pred_region
      _
    $region17: #{net_forward.1} parent=1 // pred_fallthru
      _
    // Predicated region
    $region18: #{net_forward.1} parent=1 // pred_check
      _
    $region19: #{net_forward.1} parent=1 // pred_check_branch
      %38 = sbr.rel (0) target = $region21
    $region20: #{net_forward.1} parent=1 // pred_region
      _
    $region21: #{net_forward.1} parent=1 // pred_fallthru
      _
    // Predicated region
    $region22: #{net_forward.1} parent=1 // pred_check
      _
    $region23: #{net_forward.1} parent=1 // pred_check_branch
      %40 = sbr.rel (0) target = $region25
    $region24: #{net_forward.1} parent=1 // pred_region
      _
    $region25: #{net_forward.1} parent=1 // pred_fallthru
      _
    // Predicated region
    $region26: #{net_forward.1} parent=1 // pred_check
      _
    $region27: #{net_forward.1} parent=1 // pred_check_branch
      %42 = sbr.rel (0) target = $region29
    $region28: #{net_forward.1} parent=1 // pred_region
      _
    $region29: #{net_forward.1} parent=1 // pred_fallthru
      _
    // Predicated region
    $region30: #{net_forward.1} parent=1 // pred_check
      _
    $region31: #{net_forward.1} parent=1 // pred_check_branch
      %44 = sbr.rel (0) target = $region33
    $region32: #{net_forward.1} parent=1 // pred_region
      _
    $region33: #{net_forward.1} parent=1 // pred_fallthru
      _
    // Predicated region
    $region34: #{net_forward.1} parent=1 // pred_check
      _
    $region35: #{net_forward.1} parent=1 // pred_check_branch
      %46 = sbr.rel (0) target = $region37
    $region36: #{net_forward.1} parent=1 // pred_region
      _
    $region37: #{net_forward.1} parent=1 // pred_fallthru
      _
    // Predicated region
    $region38: #{net_forward.1} parent=1 // pred_check
      _
    $region39: #{net_forward.1} parent=1 // pred_check_branch
      %48 = sbr.rel (0) target = $region41
    $region40: #{net_forward.1} parent=1 // pred_region
      %50 = vsyncadd [#allocation5], 0
      %s51 = sshll.u32 %s9, 4
      %s52 = int_to_ptr.hbm [resolvable:$true] %s51
      %s53 = sshll.u32 [#allocation4], 4
      %s54 = int_to_ptr.vmem [resolvable:$true] %s53
      %59 = dma.hbm_to_vmem [thread:$0]  %s52, 512, %s54, [#allocation5], 64, 64, 4
    $region41: #{net_forward.1} parent=1 // pred_fallthru
      _
    // Predicated region
    $region42: #{net_forward.1} parent=1 // pred_check
      _
    $region43: #{net_forward.1} parent=1 // pred_check_branch
      %61 = sbr.rel (0) target = $region45
    $region44: #{net_forward.1} parent=1 // pred_region
      _
    $region45: #{net_forward.1} parent=1 // pred_fallthru
      _
    // Predicated region
    $region46: #{net_forward.1} parent=1 // pred_check
      _
    $region47: #{net_forward.1} parent=1 // pred_check_branch
      %63 = sbr.rel (0) target = $region49
    $region48: #{net_forward.1} parent=1 // pred_region
      %65 = dma.done [#allocation3], 25088
    $region49: #{net_forward.1} parent=1 // pred_fallthru
      _
    // Predicated region
    $region50: #{net_forward.1} parent=1 // pred_check
      _
    $region51: #{net_forward.1} parent=1 // pred_check_branch
      %67 = sbr.rel (0) target = $region53
    $region52: #{net_forward.1} parent=1 // pred_region
      %69 = dma.done [#allocation5], 512
    $region53: #{net_forward.1} parent=1 // pred_fallthru
      _
    %v71 = vld [vmem:[%s0] sm:$0xff]
    %v72 = vld [vmem:[%s0 + $0x8] sm:$0xff]
    %v73 = vld [vmem:[%s0 + $0x10] sm:$0xff]
    %v74 = vld [vmem:[%s0 + $0x18] sm:$0xf]
    %v75 = vld [vmem:[%s0 + $0x1c] sm:$0xff]
    %v76 = vld [vmem:[%s0 + $0x24] sm:$0xff]
    %v77 = vld [vmem:[%s0 + $0x2c] sm:$0xff]
    %v78 = vld [vmem:[%s0 + $0x34] sm:$0xf]
    %v79 = vld [vmem:[#allocation2] sm:$0xff]
    %v80 = vld [vmem:[#allocation2 + $0x8] sm:$0xff]
    %v81 = vld [vmem:[#allocation2 + $0x10] sm:$0xff]
    %v82 = vld [vmem:[#allocation2 + $0x18] sm:$0xff]
    %v83 = vld [vmem:[#allocation2 + $0x20] sm:$0xff]
    %v84 = vld [vmem:[#allocation2 + $0x28] sm:$0xff]
    %v85 = vld [vmem:[#allocation2 + $0x30] sm:$0xff]
    %v86 = vld [vmem:[#allocation2 + $0x38] sm:$0xff]
    %v87 = vld [vmem:[#allocation2 + $0x40] sm:$0xff]
    %v88 = vld [vmem:[#allocation2 + $0x48] sm:$0xff]
    %v89 = vld [vmem:[#allocation2 + $0x50] sm:$0xff]
    %v90 = vld [vmem:[#allocation2 + $0x58] sm:$0xff]
    %v91 = vld [vmem:[#allocation2 + $0x60] sm:$0xff]
    %v92 = vld [vmem:[#allocation2 + $0x68] sm:$0xff]
    %v93 = vld [vmem:[#allocation2 + $0x70] sm:$0xff]
    %v94 = vld [vmem:[#allocation2 + $0x78] sm:$0xff]
    %v95 = vld [vmem:[#allocation2 + $0x80] sm:$0xff]
    %v96 = vld [vmem:[#allocation2 + $0x88] sm:$0xff]
    %v97 = vld [vmem:[#allocation2 + $0x90] sm:$0xff]
    %v98 = vld [vmem:[#allocation2 + $0x98] sm:$0xff]
    %v99 = vld [vmem:[#allocation2 + $0xa0] sm:$0xff]
    %v100 = vld [vmem:[#allocation2 + $0xa8] sm:$0xff]
    %v101 = vld [vmem:[#allocation2 + $0xb0] sm:$0xff]
    %v102 = vld [vmem:[#allocation2 + $0xb8] sm:$0xff]
    %v103 = vld [vmem:[#allocation2 + $0xc0] sm:$0xff]
    %v104 = vld [vmem:[#allocation2 + $0xc8] sm:$0xff]
    %v105 = vld [vmem:[#allocation2 + $0xd0] sm:$0xff]
    %v106 = vld [vmem:[#allocation2 + $0xd8] sm:$0xff]
    %v107 = vld [vmem:[#allocation2 + $0xe0] sm:$0xff]
    %v108 = vld [vmem:[#allocation2 + $0xe8] sm:$0xff]
    %v109 = vld [vmem:[#allocation2 + $0xf0] sm:$0xff]
    %v110 = vld [vmem:[#allocation2 + $0xf8] sm:$0xff]
    %v111 = vld [vmem:[#allocation2 + $0x100] sm:$0xff]
    %v112 = vld [vmem:[#allocation2 + $0x108] sm:$0xff]
    %v113 = vld [vmem:[#allocation2 + $0x110] sm:$0xff]
    %v114 = vld [vmem:[#allocation2 + $0x118] sm:$0xff]
    %v115 = vld [vmem:[#allocation2 + $0x120] sm:$0xff]
    %v116 = vld [vmem:[#allocation2 + $0x128] sm:$0xff]
    %v117 = vld [vmem:[#allocation2 + $0x130] sm:$0xff]
    %v118 = vld [vmem:[#allocation2 + $0x138] sm:$0xff]
    %v119 = vld [vmem:[#allocation2 + $0x140] sm:$0xff]
    %v120 = vld [vmem:[#allocation2 + $0x148] sm:$0xff]
    %v121 = vld [vmem:[#allocation2 + $0x150] sm:$0xff]
    %v122 = vld [vmem:[#allocation2 + $0x158] sm:$0xff]
    %v123 = vld [vmem:[#allocation2 + $0x160] sm:$0xff]
    %v124 = vld [vmem:[#allocation2 + $0x168] sm:$0xff]
    %v125 = vld [vmem:[#allocation2 + $0x170] sm:$0xff]
    %v126 = vld [vmem:[#allocation2 + $0x178] sm:$0xff]
    %v127 = vld [vmem:[#allocation2 + $0x180] sm:$0xff]
    %v128 = vld [vmem:[#allocation2 + $0x188] sm:$0xff]
    %v129 = vld [vmem:[#allocation2 + $0x190] sm:$0xff]
    %v130 = vld [vmem:[#allocation2 + $0x198] sm:$0xff]
    %v131 = vld [vmem:[#allocation2 + $0x1a0] sm:$0xff]
    %v132 = vld [vmem:[#allocation2 + $0x1a8] sm:$0xff]
    %v133 = vld [vmem:[#allocation2 + $0x1b0] sm:$0xff]
    %v134 = vld [vmem:[#allocation2 + $0x1b8] sm:$0xff]
    %v135 = vld [vmem:[#allocation2 + $0x1c0] sm:$0xff]
    %v136 = vld [vmem:[#allocation2 + $0x1c8] sm:$0xff]
    %v137 = vld [vmem:[#allocation2 + $0x1d0] sm:$0xff]
    %v138 = vld [vmem:[#allocation2 + $0x1d8] sm:$0xff]
    %v139 = vld [vmem:[#allocation2 + $0x1e0] sm:$0xff]
    %v140 = vld [vmem:[#allocation2 + $0x1e8] sm:$0xff]
    %v141 = vld [vmem:[#allocation2 + $0x1f0] sm:$0xff]
    %v142 = vld [vmem:[#allocation2 + $0x1f8] sm:$0xff]
    %v143 = vld [vmem:[#allocation2 + $0x200] sm:$0xff]
    %v144 = vld [vmem:[#allocation2 + $0x208] sm:$0xff]
    %v145 = vld [vmem:[#allocation2 + $0x210] sm:$0xff]
    %v146 = vld [vmem:[#allocation2 + $0x218] sm:$0xff]
    %v147 = vld [vmem:[#allocation2 + $0x220] sm:$0xff]
    %v148 = vld [vmem:[#allocation2 + $0x228] sm:$0xff]
    %v149 = vld [vmem:[#allocation2 + $0x230] sm:$0xff]
    %v150 = vld [vmem:[#allocation2 + $0x238] sm:$0xff]
    %v151 = vld [vmem:[#allocation2 + $0x240] sm:$0xff]
    %v152 = vld [vmem:[#allocation2 + $0x248] sm:$0xff]
    %v153 = vld [vmem:[#allocation2 + $0x250] sm:$0xff]
    %v154 = vld [vmem:[#allocation2 + $0x258] sm:$0xff]
    %v155 = vld [vmem:[#allocation2 + $0x260] sm:$0xff]
    %v156 = vld [vmem:[#allocation2 + $0x268] sm:$0xff]
    %v157 = vld [vmem:[#allocation2 + $0x270] sm:$0xff]
    %v158 = vld [vmem:[#allocation2 + $0x278] sm:$0xff]
    %v159 = vld [vmem:[#allocation2 + $0x280] sm:$0xff]
    %v160 = vld [vmem:[#allocation2 + $0x288] sm:$0xff]
    %v161 = vld [vmem:[#allocation2 + $0x290] sm:$0xff]
    %v162 = vld [vmem:[#allocation2 + $0x298] sm:$0xff]
    %v163 = vld [vmem:[#allocation2 + $0x2a0] sm:$0xff]
    %v164 = vld [vmem:[#allocation2 + $0x2a8] sm:$0xff]
    %v165 = vld [vmem:[#allocation2 + $0x2b0] sm:$0xff]
    %v166 = vld [vmem:[#allocation2 + $0x2b8] sm:$0xff]
    %v167 = vld [vmem:[#allocation2 + $0x2c0] sm:$0xff]
    %v168 = vld [vmem:[#allocation2 + $0x2c8] sm:$0xff]
    %v169 = vld [vmem:[#allocation2 + $0x2d0] sm:$0xff]
    %v170 = vld [vmem:[#allocation2 + $0x2d8] sm:$0xff]
    %v171 = vld [vmem:[#allocation2 + $0x2e0] sm:$0xff]
    %v172 = vld [vmem:[#allocation2 + $0x2e8] sm:$0xff]
    %v173 = vld [vmem:[#allocation2 + $0x2f0] sm:$0xff]
    %v174 = vld [vmem:[#allocation2 + $0x2f8] sm:$0xff]
    %v175 = vld [vmem:[#allocation2 + $0x300] sm:$0xff]
    %v176 = vld [vmem:[#allocation2 + $0x308] sm:$0xff]
    %v177 = vld [vmem:[#allocation2 + $0x310] sm:$0xff]
    %v178 = vld [vmem:[#allocation2 + $0x318] sm:$0xff]
    %v179 = vld [vmem:[#allocation2 + $0x320] sm:$0xff]
    %v180 = vld [vmem:[#allocation2 + $0x328] sm:$0xff]
    %v181 = vld [vmem:[#allocation2 + $0x330] sm:$0xff]
    %v182 = vld [vmem:[#allocation2 + $0x338] sm:$0xff]
    %v183 = vld [vmem:[#allocation2 + $0x340] sm:$0xff]
    %v184 = vld [vmem:[#allocation2 + $0x348] sm:$0xff]
    %v185 = vld [vmem:[#allocation2 + $0x350] sm:$0xff]
    %v186 = vld [vmem:[#allocation2 + $0x358] sm:$0xff]
    %v187 = vld [vmem:[#allocation2 + $0x360] sm:$0xff]
    %v188 = vld [vmem:[#allocation2 + $0x368] sm:$0xff]
    %v189 = vld [vmem:[#allocation2 + $0x370] sm:$0xff]
    %v190 = vld [vmem:[#allocation2 + $0x378] sm:$0xff]
    %v191 = vld [vmem:[#allocation2 + $0x380] sm:$0xff]
    %v192 = vld [vmem:[#allocation2 + $0x388] sm:$0xff]
    %v193 = vld [vmem:[#allocation2 + $0x390] sm:$0xff]
    %v194 = vld [vmem:[#allocation2 + $0x398] sm:$0xff]
    %v195 = vld [vmem:[#allocation2 + $0x3a0] sm:$0xff]
    %v196 = vld [vmem:[#allocation2 + $0x3a8] sm:$0xff]
    %v197 = vld [vmem:[#allocation2 + $0x3b0] sm:$0xff]
    %v198 = vld [vmem:[#allocation2 + $0x3b8] sm:$0xff]
    %v199 = vld [vmem:[#allocation2 + $0x3c0] sm:$0xff]
    %v200 = vld [vmem:[#allocation2 + $0x3c8] sm:$0xff]
    %v201 = vld [vmem:[#allocation2 + $0x3d0] sm:$0xff]
    %v202 = vld [vmem:[#allocation2 + $0x3d8] sm:$0xff]
    %v203 = vld [vmem:[#allocation2 + $0x3e0] sm:$0xff]
    %v204 = vld [vmem:[#allocation2 + $0x3e8] sm:$0xff]
    %v205 = vld [vmem:[#allocation2 + $0x3f0] sm:$0xff]
    %v206 = vld [vmem:[#allocation2 + $0x3f8] sm:$0xff]
    %v207 = vld [vmem:[#allocation2 + $0x400] sm:$0xff]
    %v208 = vld [vmem:[#allocation2 + $0x408] sm:$0xff]
    %v209 = vld [vmem:[#allocation2 + $0x410] sm:$0xff]
    %v210 = vld [vmem:[#allocation2 + $0x418] sm:$0xff]
    %v211 = vld [vmem:[#allocation2 + $0x420] sm:$0xff]
    %v212 = vld [vmem:[#allocation2 + $0x428] sm:$0xff]
    %v213 = vld [vmem:[#allocation2 + $0x430] sm:$0xff]
    %v214 = vld [vmem:[#allocation2 + $0x438] sm:$0xff]
    %v215 = vld [vmem:[#allocation2 + $0x440] sm:$0xff]
    %v216 = vld [vmem:[#allocation2 + $0x448] sm:$0xff]
    %v217 = vld [vmem:[#allocation2 + $0x450] sm:$0xff]
    %v218 = vld [vmem:[#allocation2 + $0x458] sm:$0xff]
    %v219 = vld [vmem:[#allocation2 + $0x460] sm:$0xff]
    %v220 = vld [vmem:[#allocation2 + $0x468] sm:$0xff]
    %v221 = vld [vmem:[#allocation2 + $0x470] sm:$0xff]
    %v222 = vld [vmem:[#allocation2 + $0x478] sm:$0xff]
    %v223 = vld [vmem:[#allocation2 + $0x480] sm:$0xff]
    %v224 = vld [vmem:[#allocation2 + $0x488] sm:$0xff]
    %v225 = vld [vmem:[#allocation2 + $0x490] sm:$0xff]
    %v226 = vld [vmem:[#allocation2 + $0x498] sm:$0xff]
    %v227 = vld [vmem:[#allocation2 + $0x4a0] sm:$0xff]
    %v228 = vld [vmem:[#allocation2 + $0x4a8] sm:$0xff]
    %v229 = vld [vmem:[#allocation2 + $0x4b0] sm:$0xff]
    %v230 = vld [vmem:[#allocation2 + $0x4b8] sm:$0xff]
    %v231 = vld [vmem:[#allocation2 + $0x4c0] sm:$0xff]
    %v232 = vld [vmem:[#allocation2 + $0x4c8] sm:$0xff]
    %v233 = vld [vmem:[#allocation2 + $0x4d0] sm:$0xff]
    %v234 = vld [vmem:[#allocation2 + $0x4d8] sm:$0xff]
    %v235 = vld [vmem:[#allocation2 + $0x4e0] sm:$0xff]
    %v236 = vld [vmem:[#allocation2 + $0x4e8] sm:$0xff]
    %v237 = vld [vmem:[#allocation2 + $0x4f0] sm:$0xff]
    %v238 = vld [vmem:[#allocation2 + $0x4f8] sm:$0xff]
    %v239 = vld [vmem:[#allocation2 + $0x500] sm:$0xff]
    %v240 = vld [vmem:[#allocation2 + $0x508] sm:$0xff]
    %v241 = vld [vmem:[#allocation2 + $0x510] sm:$0xff]
    %v242 = vld [vmem:[#allocation2 + $0x518] sm:$0xff]
    %v243 = vld [vmem:[#allocation2 + $0x520] sm:$0xff]
    %v244 = vld [vmem:[#allocation2 + $0x528] sm:$0xff]
    %v245 = vld [vmem:[#allocation2 + $0x530] sm:$0xff]
    %v246 = vld [vmem:[#allocation2 + $0x538] sm:$0xff]
    %v247 = vld [vmem:[#allocation2 + $0x540] sm:$0xff]
    %v248 = vld [vmem:[#allocation2 + $0x548] sm:$0xff]
    %v249 = vld [vmem:[#allocation2 + $0x550] sm:$0xff]
    %v250 = vld [vmem:[#allocation2 + $0x558] sm:$0xff]
    %v251 = vld [vmem:[#allocation2 + $0x560] sm:$0xff]
    %v252 = vld [vmem:[#allocation2 + $0x568] sm:$0xff]
    %v253 = vld [vmem:[#allocation2 + $0x570] sm:$0xff]
    %v254 = vld [vmem:[#allocation2 + $0x578] sm:$0xff]
    %v255 = vld [vmem:[#allocation2 + $0x580] sm:$0xff]
    %v256 = vld [vmem:[#allocation2 + $0x588] sm:$0xff]
    %v257 = vld [vmem:[#allocation2 + $0x590] sm:$0xff]
    %v258 = vld [vmem:[#allocation2 + $0x598] sm:$0xff]
    %v259 = vld [vmem:[#allocation2 + $0x5a0] sm:$0xff]
    %v260 = vld [vmem:[#allocation2 + $0x5a8] sm:$0xff]
    %v261 = vld [vmem:[#allocation2 + $0x5b0] sm:$0xff]
    %v262 = vld [vmem:[#allocation2 + $0x5b8] sm:$0xff]
    %v263 = vld [vmem:[#allocation2 + $0x5c0] sm:$0xff]
    %v264 = vld [vmem:[#allocation2 + $0x5c8] sm:$0xff]
    %v265 = vld [vmem:[#allocation2 + $0x5d0] sm:$0xff]
    %v266 = vld [vmem:[#allocation2 + $0x5d8] sm:$0xff]
    %v267 = vld [vmem:[#allocation2 + $0x5e0] sm:$0xff]
    %v268 = vld [vmem:[#allocation2 + $0x5e8] sm:$0xff]
    %v269 = vld [vmem:[#allocation2 + $0x5f0] sm:$0xff]
    %v270 = vld [vmem:[#allocation2 + $0x5f8] sm:$0xff]
    %v271 = vld [vmem:[#allocation2 + $0x600] sm:$0xff]
    %v272 = vld [vmem:[#allocation2 + $0x608] sm:$0xff]
    %v273 = vld [vmem:[#allocation2 + $0x610] sm:$0xff]
    %v274 = vld [vmem:[#allocation2 + $0x618] sm:$0xff]
    %v275 = vld [vmem:[%s2] sm:$0xf]
    %v277 = vperm.slane %v275, 0
    %v278 = vperm.slane %v275, 1
    %v279 = vperm.slane %v275, 2
    %v280 = vperm.slane %v275, 3
    %v293 = vunpack.c.l.b16 %v71
    %v294 = vunpack.c.h.b16 %v71
    %v295 = vunpack.c.l.b16 %v72
    %v296 = vunpack.c.h.b16 %v72
    %v297 = vunpack.c.l.b16 %v73
    %v298 = vunpack.c.h.b16 %v73
    %v299 = vunpack.c.l.b16 %v74
    %v300 = vunpack.c.l.b16 %v75
    %v301 = vunpack.c.h.b16 %v75
    %v302 = vunpack.c.l.b16 %v76
    %v303 = vunpack.c.h.b16 %v76
    %v304 = vunpack.c.l.b16 %v77
    %v305 = vunpack.c.h.b16 %v77
    %v306 = vunpack.c.l.b16 %v78
    %v307 = vpack.c.b16 %v300, %v293
    %v308 = vpack.c.b16 %v301, %v294
    %v309 = vpack.c.b16 %v302, %v295
    %v310 = vpack.c.b16 %v303, %v296
    %v311 = vpack.c.b16 %v304, %v297
    %v312 = vpack.c.b16 %v305, %v298
    %v313 = vpack.c.b16 %v306, %v299
    %v516 = vunpack.c.l.b16 %v79
    %v517 = vunpack.c.h.b16 %v79
    %v518 = vunpack.c.l.b16 %v80
    %v519 = vunpack.c.h.b16 %v80
    %v520 = vunpack.c.l.b16 %v81
    %v521 = vunpack.c.h.b16 %v81
    %v522 = vunpack.c.l.b16 %v82
    %v523 = vunpack.c.h.b16 %v82
    %v524 = vunpack.c.l.b16 %v83
    %v525 = vunpack.c.h.b16 %v83
    %v526 = vunpack.c.l.b16 %v84
    %v527 = vunpack.c.h.b16 %v84
    %v528 = vunpack.c.l.b16 %v85
    %v529 = vunpack.c.h.b16 %v85
    %v530 = vunpack.c.l.b16 %v86
    %v531 = vunpack.c.h.b16 %v86
    %v532 = vunpack.c.l.b16 %v87
    %v533 = vunpack.c.h.b16 %v87
    %v534 = vunpack.c.l.b16 %v88
    %v535 = vunpack.c.h.b16 %v88
    %v536 = vunpack.c.l.b16 %v89
    %v537 = vunpack.c.h.b16 %v89
    %v538 = vunpack.c.l.b16 %v90
    %v539 = vunpack.c.h.b16 %v90
    %v540 = vunpack.c.l.b16 %v91
    %v541 = vunpack.c.h.b16 %v91
    %v542 = vunpack.c.l.b16 %v92
    %v543 = vunpack.c.h.b16 %v92
    %v544 = vunpack.c.l.b16 %v93
    %v545 = vunpack.c.h.b16 %v93
    %v546 = vunpack.c.l.b16 %v94
    %v547 = vunpack.c.h.b16 %v94
    %v548 = vunpack.c.l.b16 %v95
    %v549 = vunpack.c.h.b16 %v95
    %v550 = vunpack.c.l.b16 %v96
    %v551 = vunpack.c.h.b16 %v96
    %v552 = vunpack.c.l.b16 %v97
    %v553 = vunpack.c.h.b16 %v97
    %v554 = vunpack.c.l.b16 %v98
    %v555 = vunpack.c.h.b16 %v98
    %v556 = vunpack.c.l.b16 %v99
    %v557 = vunpack.c.h.b16 %v99
    %v558 = vunpack.c.l.b16 %v100
    %v559 = vunpack.c.h.b16 %v100
    %v560 = vunpack.c.l.b16 %v101
    %v561 = vunpack.c.h.b16 %v101
    %v562 = vunpack.c.l.b16 %v102
    %v563 = vunpack.c.h.b16 %v102
    %v564 = vunpack.c.l.b16 %v103
    %v565 = vunpack.c.h.b16 %v103
    %v566 = vunpack.c.l.b16 %v104
    %v567 = vunpack.c.h.b16 %v104
    %v568 = vunpack.c.l.b16 %v105
    %v569 = vunpack.c.h.b16 %v105
    %v570 = vunpack.c.l.b16 %v106
    %v571 = vunpack.c.h.b16 %v106
    %v572 = vunpack.c.l.b16 %v107
    %v573 = vunpack.c.h.b16 %v107
    %v574 = vunpack.c.l.b16 %v108
    %v575 = vunpack.c.h.b16 %v108
    %v576 = vunpack.c.l.b16 %v109
    %v577 = vunpack.c.h.b16 %v109
    %v578 = vunpack.c.l.b16 %v110
    %v579 = vunpack.c.h.b16 %v110
    %v580 = vunpack.c.l.b16 %v111
    %v581 = vunpack.c.h.b16 %v111
    %v582 = vunpack.c.l.b16 %v112
    %v583 = vunpack.c.h.b16 %v112
    %v584 = vunpack.c.l.b16 %v113
    %v585 = vunpack.c.h.b16 %v113
    %v586 = vunpack.c.l.b16 %v114
    %v587 = vunpack.c.h.b16 %v114
    %v588 = vunpack.c.l.b16 %v115
    %v589 = vunpack.c.h.b16 %v115
    %v590 = vunpack.c.l.b16 %v116
    %v591 = vunpack.c.h.b16 %v116
    %v592 = vunpack.c.l.b16 %v117
    %v593 = vunpack.c.h.b16 %v117
    %v594 = vunpack.c.l.b16 %v118
    %v595 = vunpack.c.h.b16 %v118
    %v596 = vunpack.c.l.b16 %v119
    %v597 = vunpack.c.h.b16 %v119
    %v598 = vunpack.c.l.b16 %v120
    %v599 = vunpack.c.h.b16 %v120
    %v600 = vunpack.c.l.b16 %v121
    %v601 = vunpack.c.h.b16 %v121
    %v602 = vunpack.c.l.b16 %v122
    %v603 = vunpack.c.h.b16 %v122
    %v604 = vunpack.c.l.b16 %v123
    %v605 = vunpack.c.h.b16 %v123
    %v606 = vunpack.c.l.b16 %v124
    %v607 = vunpack.c.h.b16 %v124
    %v608 = vunpack.c.l.b16 %v125
    %v609 = vunpack.c.h.b16 %v125
    %v610 = vunpack.c.l.b16 %v126
    %v611 = vunpack.c.h.b16 %v126
    %v612 = vunpack.c.l.b16 %v127
    %v613 = vunpack.c.h.b16 %v127
    %v614 = vunpack.c.l.b16 %v128
    %v615 = vunpack.c.h.b16 %v128
    %v616 = vunpack.c.l.b16 %v129
    %v617 = vunpack.c.h.b16 %v129
    %v618 = vunpack.c.l.b16 %v130
    %v619 = vunpack.c.h.b16 %v130
    %v620 = vunpack.c.l.b16 %v131
    %v621 = vunpack.c.h.b16 %v131
    %v622 = vunpack.c.l.b16 %v132
    %v623 = vunpack.c.h.b16 %v132
    %v624 = vunpack.c.l.b16 %v133
    %v625 = vunpack.c.h.b16 %v133
    %v626 = vunpack.c.l.b16 %v134
    %v627 = vunpack.c.h.b16 %v134
    %v628 = vunpack.c.l.b16 %v135
    %v629 = vunpack.c.h.b16 %v135
    %v630 = vunpack.c.l.b16 %v136
    %v631 = vunpack.c.h.b16 %v136
    %v632 = vunpack.c.l.b16 %v137
    %v633 = vunpack.c.h.b16 %v137
    %v634 = vunpack.c.l.b16 %v138
    %v635 = vunpack.c.h.b16 %v138
    %v636 = vunpack.c.l.b16 %v139
    %v637 = vunpack.c.h.b16 %v139
    %v638 = vunpack.c.l.b16 %v140
    %v639 = vunpack.c.h.b16 %v140
    %v640 = vunpack.c.l.b16 %v141
    %v641 = vunpack.c.h.b16 %v141
    %v642 = vunpack.c.l.b16 %v142
    %v643 = vunpack.c.h.b16 %v142
    %v644 = vunpack.c.l.b16 %v143
    %v645 = vunpack.c.h.b16 %v143
    %v646 = vunpack.c.l.b16 %v144
    %v647 = vunpack.c.h.b16 %v144
    %v648 = vunpack.c.l.b16 %v145
    %v649 = vunpack.c.h.b16 %v145
    %v650 = vunpack.c.l.b16 %v146
    %v651 = vunpack.c.h.b16 %v146
    %v652 = vunpack.c.l.b16 %v147
    %v653 = vunpack.c.h.b16 %v147
    %v654 = vunpack.c.l.b16 %v148
    %v655 = vunpack.c.h.b16 %v148
    %v656 = vunpack.c.l.b16 %v149
    %v657 = vunpack.c.h.b16 %v149
    %v658 = vunpack.c.l.b16 %v150
    %v659 = vunpack.c.h.b16 %v150
    %v660 = vunpack.c.l.b16 %v151
    %v661 = vunpack.c.h.b16 %v151
    %v662 = vunpack.c.l.b16 %v152
    %v663 = vunpack.c.h.b16 %v152
    %v664 = vunpack.c.l.b16 %v153
    %v665 = vunpack.c.h.b16 %v153
    %v666 = vunpack.c.l.b16 %v154
    %v667 = vunpack.c.h.b16 %v154
    %v668 = vunpack.c.l.b16 %v155
    %v669 = vunpack.c.h.b16 %v155
    %v670 = vunpack.c.l.b16 %v156
    %v671 = vunpack.c.h.b16 %v156
    %v672 = vunpack.c.l.b16 %v157
    %v673 = vunpack.c.h.b16 %v157
    %v674 = vunpack.c.l.b16 %v158
    %v675 = vunpack.c.h.b16 %v158
    %v676 = vunpack.c.l.b16 %v159
    %v677 = vunpack.c.h.b16 %v159
    %v678 = vunpack.c.l.b16 %v160
    %v679 = vunpack.c.h.b16 %v160
    %v680 = vunpack.c.l.b16 %v161
    %v681 = vunpack.c.h.b16 %v161
    %v682 = vunpack.c.l.b16 %v162
    %v683 = vunpack.c.h.b16 %v162
    %v684 = vunpack.c.l.b16 %v163
    %v685 = vunpack.c.h.b16 %v163
    %v686 = vunpack.c.l.b16 %v164
    %v687 = vunpack.c.h.b16 %v164
    %v688 = vunpack.c.l.b16 %v165
    %v689 = vunpack.c.h.b16 %v165
    %v690 = vunpack.c.l.b16 %v166
    %v691 = vunpack.c.h.b16 %v166
    %v692 = vunpack.c.l.b16 %v167
    %v693 = vunpack.c.h.b16 %v167
    %v694 = vunpack.c.l.b16 %v168
    %v695 = vunpack.c.h.b16 %v168
    %v696 = vunpack.c.l.b16 %v169
    %v697 = vunpack.c.h.b16 %v169
    %v698 = vunpack.c.l.b16 %v170
    %v699 = vunpack.c.h.b16 %v170
    %v700 = vunpack.c.l.b16 %v171
    %v701 = vunpack.c.h.b16 %v171
    %v702 = vunpack.c.l.b16 %v172
    %v703 = vunpack.c.h.b16 %v172
    %v704 = vunpack.c.l.b16 %v173
    %v705 = vunpack.c.h.b16 %v173
    %v706 = vunpack.c.l.b16 %v174
    %v707 = vunpack.c.h.b16 %v174
    %v708 = vunpack.c.l.b16 %v175
    %v709 = vunpack.c.h.b16 %v175
    %v710 = vunpack.c.l.b16 %v176
    %v711 = vunpack.c.h.b16 %v176
    %v712 = vunpack.c.l.b16 %v177
    %v713 = vunpack.c.h.b16 %v177
    %v714 = vunpack.c.l.b16 %v178
    %v715 = vunpack.c.h.b16 %v178
    %v716 = vunpack.c.l.b16 %v179
    %v717 = vunpack.c.h.b16 %v179
    %v718 = vunpack.c.l.b16 %v180
    %v719 = vunpack.c.h.b16 %v180
    %v720 = vunpack.c.l.b16 %v181
    %v721 = vunpack.c.h.b16 %v181
    %v722 = vunpack.c.l.b16 %v182
    %v723 = vunpack.c.h.b16 %v182
    %v724 = vunpack.c.l.b16 %v183
    %v725 = vunpack.c.h.b16 %v183
    %v726 = vunpack.c.l.b16 %v184
    %v727 = vunpack.c.h.b16 %v184
    %v728 = vunpack.c.l.b16 %v185
    %v729 = vunpack.c.h.b16 %v185
    %v730 = vunpack.c.l.b16 %v186
    %v731 = vunpack.c.h.b16 %v186
    %v732 = vunpack.c.l.b16 %v187
    %v733 = vunpack.c.h.b16 %v187
    %v734 = vunpack.c.l.b16 %v188
    %v735 = vunpack.c.h.b16 %v188
    %v736 = vunpack.c.l.b16 %v189
    %v737 = vunpack.c.h.b16 %v189
    %v738 = vunpack.c.l.b16 %v190
    %v739 = vunpack.c.h.b16 %v190
    %v740 = vunpack.c.l.b16 %v191
    %v741 = vunpack.c.h.b16 %v191
    %v742 = vunpack.c.l.b16 %v192
    %v743 = vunpack.c.h.b16 %v192
    %v744 = vunpack.c.l.b16 %v193
    %v745 = vunpack.c.h.b16 %v193
    %v746 = vunpack.c.l.b16 %v194
    %v747 = vunpack.c.h.b16 %v194
    %v748 = vunpack.c.l.b16 %v195
    %v749 = vunpack.c.h.b16 %v195
    %v750 = vunpack.c.l.b16 %v196
    %v751 = vunpack.c.h.b16 %v196
    %v752 = vunpack.c.l.b16 %v197
    %v753 = vunpack.c.h.b16 %v197
    %v754 = vunpack.c.l.b16 %v198
    %v755 = vunpack.c.h.b16 %v198
    %v756 = vunpack.c.l.b16 %v199
    %v757 = vunpack.c.h.b16 %v199
    %v758 = vunpack.c.l.b16 %v200
    %v759 = vunpack.c.h.b16 %v200
    %v760 = vunpack.c.l.b16 %v201
    %v761 = vunpack.c.h.b16 %v201
    %v762 = vunpack.c.l.b16 %v202
    %v763 = vunpack.c.h.b16 %v202
    %v764 = vunpack.c.l.b16 %v203
    %v765 = vunpack.c.h.b16 %v203
    %v766 = vunpack.c.l.b16 %v204
    %v767 = vunpack.c.h.b16 %v204
    %v768 = vunpack.c.l.b16 %v205
    %v769 = vunpack.c.h.b16 %v205
    %v770 = vunpack.c.l.b16 %v206
    %v771 = vunpack.c.h.b16 %v206
    %v772 = vunpack.c.l.b16 %v207
    %v773 = vunpack.c.h.b16 %v207
    %v774 = vunpack.c.l.b16 %v208
    %v775 = vunpack.c.h.b16 %v208
    %v776 = vunpack.c.l.b16 %v209
    %v777 = vunpack.c.h.b16 %v209
    %v778 = vunpack.c.l.b16 %v210
    %v779 = vunpack.c.h.b16 %v210
    %v780 = vunpack.c.l.b16 %v211
    %v781 = vunpack.c.h.b16 %v211
    %v782 = vunpack.c.l.b16 %v212
    %v783 = vunpack.c.h.b16 %v212
    %v784 = vunpack.c.l.b16 %v213
    %v785 = vunpack.c.h.b16 %v213
    %v786 = vunpack.c.l.b16 %v214
    %v787 = vunpack.c.h.b16 %v214
    %v788 = vunpack.c.l.b16 %v215
    %v789 = vunpack.c.h.b16 %v215
    %v790 = vunpack.c.l.b16 %v216
    %v791 = vunpack.c.h.b16 %v216
    %v792 = vunpack.c.l.b16 %v217
    %v793 = vunpack.c.h.b16 %v217
    %v794 = vunpack.c.l.b16 %v218
    %v795 = vunpack.c.h.b16 %v218
    %v796 = vunpack.c.l.b16 %v219
    %v797 = vunpack.c.h.b16 %v219
    %v798 = vunpack.c.l.b16 %v220
    %v799 = vunpack.c.h.b16 %v220
    %v800 = vunpack.c.l.b16 %v221
    %v801 = vunpack.c.h.b16 %v221
    %v802 = vunpack.c.l.b16 %v222
    %v803 = vunpack.c.h.b16 %v222
    %v804 = vunpack.c.l.b16 %v223
    %v805 = vunpack.c.h.b16 %v223
    %v806 = vunpack.c.l.b16 %v224
    %v807 = vunpack.c.h.b16 %v224
    %v808 = vunpack.c.l.b16 %v225
    %v809 = vunpack.c.h.b16 %v225
    %v810 = vunpack.c.l.b16 %v226
    %v811 = vunpack.c.h.b16 %v226
    %v812 = vunpack.c.l.b16 %v227
    %v813 = vunpack.c.h.b16 %v227
    %v814 = vunpack.c.l.b16 %v228
    %v815 = vunpack.c.h.b16 %v228
    %v816 = vunpack.c.l.b16 %v229
    %v817 = vunpack.c.h.b16 %v229
    %v818 = vunpack.c.l.b16 %v230
    %v819 = vunpack.c.h.b16 %v230
    %v820 = vunpack.c.l.b16 %v231
    %v821 = vunpack.c.h.b16 %v231
    %v822 = vunpack.c.l.b16 %v232
    %v823 = vunpack.c.h.b16 %v232
    %v824 = vunpack.c.l.b16 %v233
    %v825 = vunpack.c.h.b16 %v233
    %v826 = vunpack.c.l.b16 %v234
    %v827 = vunpack.c.h.b16 %v234
    %v828 = vunpack.c.l.b16 %v235
    %v829 = vunpack.c.h.b16 %v235
    %v830 = vunpack.c.l.b16 %v236
    %v831 = vunpack.c.h.b16 %v236
    %v832 = vunpack.c.l.b16 %v237
    %v833 = vunpack.c.h.b16 %v237
    %v834 = vunpack.c.l.b16 %v238
    %v835 = vunpack.c.h.b16 %v238
    %v836 = vunpack.c.l.b16 %v239
    %v837 = vunpack.c.h.b16 %v239
    %v838 = vunpack.c.l.b16 %v240
    %v839 = vunpack.c.h.b16 %v240
    %v840 = vunpack.c.l.b16 %v241
    %v841 = vunpack.c.h.b16 %v241
    %v842 = vunpack.c.l.b16 %v242
    %v843 = vunpack.c.h.b16 %v242
    %v844 = vunpack.c.l.b16 %v243
    %v845 = vunpack.c.h.b16 %v243
    %v846 = vunpack.c.l.b16 %v244
    %v847 = vunpack.c.h.b16 %v244
    %v848 = vunpack.c.l.b16 %v245
    %v849 = vunpack.c.h.b16 %v245
    %v850 = vunpack.c.l.b16 %v246
    %v851 = vunpack.c.h.b16 %v246
    %v852 = vunpack.c.l.b16 %v247
    %v853 = vunpack.c.h.b16 %v247
    %v854 = vunpack.c.l.b16 %v248
    %v855 = vunpack.c.h.b16 %v248
    %v856 = vunpack.c.l.b16 %v249
    %v857 = vunpack.c.h.b16 %v249
    %v858 = vunpack.c.l.b16 %v250
    %v859 = vunpack.c.h.b16 %v250
    %v860 = vunpack.c.l.b16 %v251
    %v861 = vunpack.c.h.b16 %v251
    %v862 = vunpack.c.l.b16 %v252
    %v863 = vunpack.c.h.b16 %v252
    %v864 = vunpack.c.l.b16 %v253
    %v865 = vunpack.c.h.b16 %v253
    %v866 = vunpack.c.l.b16 %v254
    %v867 = vunpack.c.h.b16 %v254
    %v868 = vunpack.c.l.b16 %v255
    %v869 = vunpack.c.h.b16 %v255
    %v870 = vunpack.c.l.b16 %v256
    %v871 = vunpack.c.h.b16 %v256
    %v872 = vunpack.c.l.b16 %v257
    %v873 = vunpack.c.h.b16 %v257
    %v874 = vunpack.c.l.b16 %v258
    %v875 = vunpack.c.h.b16 %v258
    %v876 = vunpack.c.l.b16 %v259
    %v877 = vunpack.c.h.b16 %v259
    %v878 = vunpack.c.l.b16 %v260
    %v879 = vunpack.c.h.b16 %v260
    %v880 = vunpack.c.l.b16 %v261
    %v881 = vunpack.c.h.b16 %v261
    %v882 = vunpack.c.l.b16 %v262
    %v883 = vunpack.c.h.b16 %v262
    %v884 = vunpack.c.l.b16 %v263
    %v885 = vunpack.c.h.b16 %v263
    %v886 = vunpack.c.l.b16 %v264
    %v887 = vunpack.c.h.b16 %v264
    %v888 = vunpack.c.l.b16 %v265
    %v889 = vunpack.c.h.b16 %v265
    %v890 = vunpack.c.l.b16 %v266
    %v891 = vunpack.c.h.b16 %v266
    %v892 = vunpack.c.l.b16 %v267
    %v893 = vunpack.c.h.b16 %v267
    %v894 = vunpack.c.l.b16 %v268
    %v895 = vunpack.c.h.b16 %v268
    %v896 = vunpack.c.l.b16 %v269
    %v897 = vunpack.c.h.b16 %v269
    %v898 = vunpack.c.l.b16 %v270
    %v899 = vunpack.c.h.b16 %v270
    %v900 = vunpack.c.l.b16 %v271
    %v901 = vunpack.c.h.b16 %v271
    %v902 = vunpack.c.l.b16 %v272
    %v903 = vunpack.c.h.b16 %v272
    %v904 = vunpack.c.l.b16 %v273
    %v905 = vunpack.c.h.b16 %v273
    %v906 = vunpack.c.l.b16 %v274
    %v907 = vunpack.c.h.b16 %v274
    %v908 = vpack.c.b16 %v520, %v516
    %v909 = vpack.c.b16 %v521, %v517
    %v910 = vpack.c.b16 %v522, %v518
    %v911 = vpack.c.b16 %v523, %v519
    %v912 = vpack.c.b16 %v528, %v524
    %v913 = vpack.c.b16 %v529, %v525
    %v914 = vpack.c.b16 %v530, %v526
    %v915 = vpack.c.b16 %v531, %v527
    %v916 = vpack.c.b16 %v536, %v532
    %v917 = vpack.c.b16 %v537, %v533
    %v918 = vpack.c.b16 %v538, %v534
    %v919 = vpack.c.b16 %v539, %v535
    %v920 = vpack.c.b16 %v544, %v540
    %v921 = vpack.c.b16 %v545, %v541
    %v922 = vpack.c.b16 %v546, %v542
    %v923 = vpack.c.b16 %v547, %v543
    %v924 = vpack.c.b16 %v552, %v548
    %v925 = vpack.c.b16 %v553, %v549
    %v926 = vpack.c.b16 %v554, %v550
    %v927 = vpack.c.b16 %v555, %v551
    %v928 = vpack.c.b16 %v560, %v556
    %v929 = vpack.c.b16 %v561, %v557
    %v930 = vpack.c.b16 %v562, %v558
    %v931 = vpack.c.b16 %v563, %v559
    %v932 = vpack.c.b16 %v568, %v564
    %v933 = vpack.c.b16 %v569, %v565
    %v934 = vpack.c.b16 %v570, %v566
    %v935 = vpack.c.b16 %v571, %v567
    %v936 = vpack.c.b16 %v576, %v572
    %v937 = vpack.c.b16 %v577, %v573
    %v938 = vpack.c.b16 %v578, %v574
    %v939 = vpack.c.b16 %v579, %v575
    %v940 = vpack.c.b16 %v584, %v580
    %v941 = vpack.c.b16 %v585, %v581
    %v942 = vpack.c.b16 %v586, %v582
    %v943 = vpack.c.b16 %v587, %v583
    %v944 = vpack.c.b16 %v592, %v588
    %v945 = vpack.c.b16 %v593, %v589
    %v946 = vpack.c.b16 %v594, %v590
    %v947 = vpack.c.b16 %v595, %v591
    %v948 = vpack.c.b16 %v600, %v596
    %v949 = vpack.c.b16 %v601, %v597
    %v950 = vpack.c.b16 %v602, %v598
    %v951 = vpack.c.b16 %v603, %v599
    %v952 = vpack.c.b16 %v608, %v604
    %v953 = vpack.c.b16 %v609, %v605
    %v954 = vpack.c.b16 %v610, %v606
    %v955 = vpack.c.b16 %v611, %v607
    %v956 = vpack.c.b16 %v616, %v612
    %v957 = vpack.c.b16 %v617, %v613
    %v958 = vpack.c.b16 %v618, %v614
    %v959 = vpack.c.b16 %v619, %v615
    %v960 = vpack.c.b16 %v624, %v620
    %v961 = vpack.c.b16 %v625, %v621
    %v962 = vpack.c.b16 %v626, %v622
    %v963 = vpack.c.b16 %v627, %v623
    %v964 = vpack.c.b16 %v632, %v628
    %v965 = vpack.c.b16 %v633, %v629
    %v966 = vpack.c.b16 %v634, %v630
    %v967 = vpack.c.b16 %v635, %v631
    %v968 = vpack.c.b16 %v640, %v636
    %v969 = vpack.c.b16 %v641, %v637
    %v970 = vpack.c.b16 %v642, %v638
    %v971 = vpack.c.b16 %v643, %v639
    %v972 = vpack.c.b16 %v648, %v644
    %v973 = vpack.c.b16 %v649, %v645
    %v974 = vpack.c.b16 %v650, %v646
    %v975 = vpack.c.b16 %v651, %v647
    %v976 = vpack.c.b16 %v656, %v652
    %v977 = vpack.c.b16 %v657, %v653
    %v978 = vpack.c.b16 %v658, %v654
    %v979 = vpack.c.b16 %v659, %v655
    %v980 = vpack.c.b16 %v664, %v660
    %v981 = vpack.c.b16 %v665, %v661
    %v982 = vpack.c.b16 %v666, %v662
    %v983 = vpack.c.b16 %v667, %v663
    %v984 = vpack.c.b16 %v672, %v668
    %v985 = vpack.c.b16 %v673, %v669
    %v986 = vpack.c.b16 %v674, %v670
    %v987 = vpack.c.b16 %v675, %v671
    %v988 = vpack.c.b16 %v680, %v676
    %v989 = vpack.c.b16 %v681, %v677
    %v990 = vpack.c.b16 %v682, %v678
    %v991 = vpack.c.b16 %v683, %v679
    %v992 = vpack.c.b16 %v688, %v684
    %v993 = vpack.c.b16 %v689, %v685
    %v994 = vpack.c.b16 %v690, %v686
    %v995 = vpack.c.b16 %v691, %v687
    %v996 = vpack.c.b16 %v696, %v692
    %v997 = vpack.c.b16 %v697, %v693
    %v998 = vpack.c.b16 %v698, %v694
    %v999 = vpack.c.b16 %v699, %v695
    %v1000 = vpack.c.b16 %v704, %v700
    %v1001 = vpack.c.b16 %v705, %v701
    %v1002 = vpack.c.b16 %v706, %v702
    %v1003 = vpack.c.b16 %v707, %v703
    %v1004 = vpack.c.b16 %v712, %v708
    %v1005 = vpack.c.b16 %v713, %v709
    %v1006 = vpack.c.b16 %v714, %v710
    %v1007 = vpack.c.b16 %v715, %v711
    %v1008 = vpack.c.b16 %v720, %v716
    %v1009 = vpack.c.b16 %v721, %v717
    %v1010 = vpack.c.b16 %v722, %v718
    %v1011 = vpack.c.b16 %v723, %v719
    %v1012 = vpack.c.b16 %v728, %v724
    %v1013 = vpack.c.b16 %v729, %v725
    %v1014 = vpack.c.b16 %v730, %v726
    %v1015 = vpack.c.b16 %v731, %v727
    %v1016 = vpack.c.b16 %v736, %v732
    %v1017 = vpack.c.b16 %v737, %v733
    %v1018 = vpack.c.b16 %v738, %v734
    %v1019 = vpack.c.b16 %v739, %v735
    %v1020 = vpack.c.b16 %v744, %v740
    %v1021 = vpack.c.b16 %v745, %v741
    %v1022 = vpack.c.b16 %v746, %v742
    %v1023 = vpack.c.b16 %v747, %v743
    %v1024 = vpack.c.b16 %v752, %v748
    %v1025 = vpack.c.b16 %v753, %v749
    %v1026 = vpack.c.b16 %v754, %v750
    %v1027 = vpack.c.b16 %v755, %v751
    %v1028 = vpack.c.b16 %v760, %v756
    %v1029 = vpack.c.b16 %v761, %v757
    %v1030 = vpack.c.b16 %v762, %v758
    %v1031 = vpack.c.b16 %v763, %v759
    %v1032 = vpack.c.b16 %v768, %v764
    %v1033 = vpack.c.b16 %v769, %v765
    %v1034 = vpack.c.b16 %v770, %v766
    %v1035 = vpack.c.b16 %v771, %v767
    %v1036 = vpack.c.b16 %v776, %v772
    %v1037 = vpack.c.b16 %v777, %v773
    %v1038 = vpack.c.b16 %v778, %v774
    %v1039 = vpack.c.b16 %v779, %v775
    %v1040 = vpack.c.b16 %v784, %v780
    %v1041 = vpack.c.b16 %v785, %v781
    %v1042 = vpack.c.b16 %v786, %v782
    %v1043 = vpack.c.b16 %v787, %v783
    %v1044 = vpack.c.b16 %v792, %v788
    %v1045 = vpack.c.b16 %v793, %v789
    %v1046 = vpack.c.b16 %v794, %v790
    %v1047 = vpack.c.b16 %v795, %v791
    %v1048 = vpack.c.b16 %v800, %v796
    %v1049 = vpack.c.b16 %v801, %v797
    %v1050 = vpack.c.b16 %v802, %v798
    %v1051 = vpack.c.b16 %v803, %v799
    %v1052 = vpack.c.b16 %v808, %v804
    %v1053 = vpack.c.b16 %v809, %v805
    %v1054 = vpack.c.b16 %v810, %v806
    %v1055 = vpack.c.b16 %v811, %v807
    %v1056 = vpack.c.b16 %v816, %v812
    %v1057 = vpack.c.b16 %v817, %v813
    %v1058 = vpack.c.b16 %v818, %v814
    %v1059 = vpack.c.b16 %v819, %v815
    %v1060 = vpack.c.b16 %v824, %v820
    %v1061 = vpack.c.b16 %v825, %v821
    %v1062 = vpack.c.b16 %v826, %v822
    %v1063 = vpack.c.b16 %v827, %v823
    %v1064 = vpack.c.b16 %v832, %v828
    %v1065 = vpack.c.b16 %v833, %v829
    %v1066 = vpack.c.b16 %v834, %v830
    %v1067 = vpack.c.b16 %v835, %v831
    %v1068 = vpack.c.b16 %v840, %v836
    %v1069 = vpack.c.b16 %v841, %v837
    %v1070 = vpack.c.b16 %v842, %v838
    %v1071 = vpack.c.b16 %v843, %v839
    %v1072 = vpack.c.b16 %v848, %v844
    %v1073 = vpack.c.b16 %v849, %v845
    %v1074 = vpack.c.b16 %v850, %v846
    %v1075 = vpack.c.b16 %v851, %v847
    %v1076 = vpack.c.b16 %v856, %v852
    %v1077 = vpack.c.b16 %v857, %v853
    %v1078 = vpack.c.b16 %v858, %v854
    %v1079 = vpack.c.b16 %v859, %v855
    %v1080 = vpack.c.b16 %v864, %v860
    %v1081 = vpack.c.b16 %v865, %v861
    %v1082 = vpack.c.b16 %v866, %v862
    %v1083 = vpack.c.b16 %v867, %v863
    %v1084 = vpack.c.b16 %v872, %v868
    %v1085 = vpack.c.b16 %v873, %v869
    %v1086 = vpack.c.b16 %v874, %v870
    %v1087 = vpack.c.b16 %v875, %v871
    %v1088 = vpack.c.b16 %v880, %v876
    %v1089 = vpack.c.b16 %v881, %v877
    %v1090 = vpack.c.b16 %v882, %v878
    %v1091 = vpack.c.b16 %v883, %v879
    %v1092 = vpack.c.b16 %v888, %v884
    %v1093 = vpack.c.b16 %v889, %v885
    %v1094 = vpack.c.b16 %v890, %v886
    %v1095 = vpack.c.b16 %v891, %v887
    %v1096 = vpack.c.b16 %v896, %v892
    %v1097 = vpack.c.b16 %v897, %v893
    %v1098 = vpack.c.b16 %v898, %v894
    %v1099 = vpack.c.b16 %v899, %v895
    %v1100 = vpack.c.b16 %v904, %v900
    %v1101 = vpack.c.b16 %v905, %v901
    %v1102 = vpack.c.b16 %v906, %v902
    %v1103 = vpack.c.b16 %v907, %v903
    %vm1300 = vcmask 130048
    %v1302 = vsel %vm1300, %v313, 0
    %1304 = vmatpush.bf16.msra.mxu0 %v936
    %1305 = vmatpush.bf16.msra.mxu0 %v932
    %1306 = vmatpush.bf16.msra.mxu0 %v928
    %1307 = vmatpush.bf16.msra.mxu0 %v924
    %1308 = vmatpush.bf16.msra.mxu0 %v920
    %1309 = vmatpush.bf16.msra.mxu0 %v916
    %1310 = vmatpush.bf16.msra.mxu0 %v912
    %1311 = vmatpush.bf16.msra.mxu0 %v908
    %1312 = vmatmul.bf16.gmra.mxu0 %v307
    %v1313 = vpop.f32.mrf.mxu0
    %v1314 = vadd.f32 %v277, %v1313
    %v1315 = vpop.f32.mrf.mxu0
    %v1316 = vadd.f32 %v277, %v1315
    %1317 = vdwg.mxu0
    %1318 = vmatpush.bf16.msra.mxu0 %v968
    %1319 = vmatpush.bf16.msra.mxu0 %v964
    %1320 = vmatpush.bf16.msra.mxu0 %v960
    %1321 = vmatpush.bf16.msra.mxu0 %v956
    %1322 = vmatpush.bf16.msra.mxu0 %v952
    %1323 = vmatpush.bf16.msra.mxu0 %v948
    %1324 = vmatpush.bf16.msra.mxu0 %v944
    %1325 = vmatpush.bf16.msra.mxu0 %v940
    %1326 = vmatmul.bf16.gmra.mxu0 %v308
    %v1327 = vpop.f32.mrf.mxu0
    %v1328 = vadd.f32 %v1314, %v1327
    %v1329 = vpop.f32.mrf.mxu0
    %v1330 = vadd.f32 %v1316, %v1329
    %1331 = vdwg.mxu0
    %1332 = vmatpush.bf16.msra.mxu0 %v1000
    %1333 = vmatpush.bf16.msra.mxu0 %v996
    %1334 = vmatpush.bf16.msra.mxu0 %v992
    %1335 = vmatpush.bf16.msra.mxu0 %v988
    %1336 = vmatpush.bf16.msra.mxu0 %v984
    %1337 = vmatpush.bf16.msra.mxu0 %v980
    %1338 = vmatpush.bf16.msra.mxu0 %v976
    %1339 = vmatpush.bf16.msra.mxu0 %v972
    %1340 = vmatmul.bf16.gmra.mxu0 %v309
    %v1341 = vpop.f32.mrf.mxu0
    %v1342 = vadd.f32 %v1328, %v1341
    %v1343 = vpop.f32.mrf.mxu0
    %v1344 = vadd.f32 %v1330, %v1343
    %1345 = vdwg.mxu0
    %1346 = vmatpush.bf16.msra.mxu0 %v1032
    %1347 = vmatpush.bf16.msra.mxu0 %v1028
    %1348 = vmatpush.bf16.msra.mxu0 %v1024
    %1349 = vmatpush.bf16.msra.mxu0 %v1020
    %1350 = vmatpush.bf16.msra.mxu0 %v1016
    %1351 = vmatpush.bf16.msra.mxu0 %v1012
    %1352 = vmatpush.bf16.msra.mxu0 %v1008
    %1353 = vmatpush.bf16.msra.mxu0 %v1004
    %1354 = vmatmul.bf16.gmra.mxu0 %v310
    %v1355 = vpop.f32.mrf.mxu0
    %v1356 = vadd.f32 %v1342, %v1355
    %v1357 = vpop.f32.mrf.mxu0
    %v1358 = vadd.f32 %v1344, %v1357
    %1359 = vdwg.mxu0
    %1360 = vmatpush.bf16.msra.mxu0 %v1064
    %1361 = vmatpush.bf16.msra.mxu0 %v1060
    %1362 = vmatpush.bf16.msra.mxu0 %v1056
    %1363 = vmatpush.bf16.msra.mxu0 %v1052
    %1364 = vmatpush.bf16.msra.mxu0 %v1048
    %1365 = vmatpush.bf16.msra.mxu0 %v1044
    %1366 = vmatpush.bf16.msra.mxu0 %v1040
    %1367 = vmatpush.bf16.msra.mxu0 %v1036
    %1368 = vmatmul.bf16.gmra.mxu0 %v311
    %v1369 = vpop.f32.mrf.mxu0
    %v1370 = vadd.f32 %v1356, %v1369
    %v1371 = vpop.f32.mrf.mxu0
    %v1372 = vadd.f32 %v1358, %v1371
    %1373 = vdwg.mxu0
    %1374 = vmatpush.bf16.msra.mxu0 %v1096
    %1375 = vmatpush.bf16.msra.mxu0 %v1092
    %1376 = vmatpush.bf16.msra.mxu0 %v1088
    %1377 = vmatpush.bf16.msra.mxu0 %v1084
    %1378 = vmatpush.bf16.msra.mxu0 %v1080
    %1379 = vmatpush.bf16.msra.mxu0 %v1076
    %1380 = vmatpush.bf16.msra.mxu0 %v1072
    %1381 = vmatpush.bf16.msra.mxu0 %v1068
    %1382 = vmatmul.bf16.gmra.mxu0 %v312
    %v1383 = vpop.f32.mrf.mxu0
    %v1384 = vadd.f32 %v1370, %v1383
    %v1385 = vpop.f32.mrf.mxu0
    %v1386 = vadd.f32 %v1372, %v1385
    %1387 = vdwg.mxu0
    %1388 = vmatpush.bf16.msra.mxu0 0
    %1389 = vmatpush.bf16.msra.mxu0 0
    %1390 = vmatpush.bf16.msra.mxu0 0
    %1391 = vmatpush.bf16.msra.mxu0 0
    %1392 = vmatpush.bf16.msra.mxu0 0
    %1393 = vmatpush.bf16.msra.mxu0 0
    %1394 = vmatpush.bf16.msra.mxu0 0
    %1395 = vmatpush.bf16.msra.mxu0 %v1100
    %1396 = vmatmul.bf16.gmra.mxu0 %v1302
    %v1397 = vpop.f32.mrf.mxu0
    %v1398 = vadd.f32 %v1384, %v1397
    %v1399 = vpop.f32.mrf.mxu0
    %v1400 = vadd.f32 %v1386, %v1399
    %1401 = vdwg.mxu0
    %1402 = vmatpush.bf16.msra.mxu0 %v937
    %1403 = vmatpush.bf16.msra.mxu0 %v933
    %1404 = vmatpush.bf16.msra.mxu0 %v929
    %1405 = vmatpush.bf16.msra.mxu0 %v925
    %1406 = vmatpush.bf16.msra.mxu0 %v921
    %1407 = vmatpush.bf16.msra.mxu0 %v917
    %1408 = vmatpush.bf16.msra.mxu0 %v913
    %1409 = vmatpush.bf16.msra.mxu0 %v909
    %1410 = vmatmul.bf16.gmra.mxu0 %v307
    %v1411 = vpop.f32.mrf.mxu0
    %v1412 = vadd.f32 %v278, %v1411
    %v1413 = vpop.f32.mrf.mxu0
    %v1414 = vadd.f32 %v278, %v1413
    %1415 = vdwg.mxu0
    %1416 = vmatpush.bf16.msra.mxu0 %v969
    %1417 = vmatpush.bf16.msra.mxu0 %v965
    %1418 = vmatpush.bf16.msra.mxu0 %v961
    %1419 = vmatpush.bf16.msra.mxu0 %v957
    %1420 = vmatpush.bf16.msra.mxu0 %v953
    %1421 = vmatpush.bf16.msra.mxu0 %v949
    %1422 = vmatpush.bf16.msra.mxu0 %v945
    %1423 = vmatpush.bf16.msra.mxu0 %v941
    %1424 = vmatmul.bf16.gmra.mxu0 %v308
    %v1425 = vpop.f32.mrf.mxu0
    %v1426 = vadd.f32 %v1412, %v1425
    %v1427 = vpop.f32.mrf.mxu0
    %v1428 = vadd.f32 %v1414, %v1427
    %1429 = vdwg.mxu0
    %1430 = vmatpush.bf16.msra.mxu0 %v1001
    %1431 = vmatpush.bf16.msra.mxu0 %v997
    %1432 = vmatpush.bf16.msra.mxu0 %v993
    %1433 = vmatpush.bf16.msra.mxu0 %v989
    %1434 = vmatpush.bf16.msra.mxu0 %v985
    %1435 = vmatpush.bf16.msra.mxu0 %v981
    %1436 = vmatpush.bf16.msra.mxu0 %v977
    %1437 = vmatpush.bf16.msra.mxu0 %v973
    %1438 = vmatmul.bf16.gmra.mxu0 %v309
    %v1439 = vpop.f32.mrf.mxu0
    %v1440 = vadd.f32 %v1426, %v1439
    %v1441 = vpop.f32.mrf.mxu0
    %v1442 = vadd.f32 %v1428, %v1441
    %1443 = vdwg.mxu0
    %1444 = vmatpush.bf16.msra.mxu0 %v1033
    %1445 = vmatpush.bf16.msra.mxu0 %v1029
    %1446 = vmatpush.bf16.msra.mxu0 %v1025
    %1447 = vmatpush.bf16.msra.mxu0 %v1021
    %1448 = vmatpush.bf16.msra.mxu0 %v1017
    %1449 = vmatpush.bf16.msra.mxu0 %v1013
    %1450 = vmatpush.bf16.msra.mxu0 %v1009
    %1451 = vmatpush.bf16.msra.mxu0 %v1005
    %1452 = vmatmul.bf16.gmra.mxu0 %v310
    %v1453 = vpop.f32.mrf.mxu0
    %v1454 = vadd.f32 %v1440, %v1453
    %v1455 = vpop.f32.mrf.mxu0
    %v1456 = vadd.f32 %v1442, %v1455
    %1457 = vdwg.mxu0
    %1458 = vmatpush.bf16.msra.mxu0 %v1065
    %1459 = vmatpush.bf16.msra.mxu0 %v1061
    %1460 = vmatpush.bf16.msra.mxu0 %v1057
    %1461 = vmatpush.bf16.msra.mxu0 %v1053
    %1462 = vmatpush.bf16.msra.mxu0 %v1049
    %1463 = vmatpush.bf16.msra.mxu0 %v1045
    %1464 = vmatpush.bf16.msra.mxu0 %v1041
    %1465 = vmatpush.bf16.msra.mxu0 %v1037
    %1466 = vmatmul.bf16.gmra.mxu0 %v311
    %v1467 = vpop.f32.mrf.mxu0
    %v1468 = vadd.f32 %v1454, %v1467
    %v1469 = vpop.f32.mrf.mxu0
    %v1470 = vadd.f32 %v1456, %v1469
    %1471 = vdwg.mxu0
    %1472 = vmatpush.bf16.msra.mxu0 %v1097
    %1473 = vmatpush.bf16.msra.mxu0 %v1093
    %1474 = vmatpush.bf16.msra.mxu0 %v1089
    %1475 = vmatpush.bf16.msra.mxu0 %v1085
    %1476 = vmatpush.bf16.msra.mxu0 %v1081
    %1477 = vmatpush.bf16.msra.mxu0 %v1077
    %1478 = vmatpush.bf16.msra.mxu0 %v1073
    %1479 = vmatpush.bf16.msra.mxu0 %v1069
    %1480 = vmatmul.bf16.gmra.mxu0 %v312
    %v1481 = vpop.f32.mrf.mxu0
    %v1482 = vadd.f32 %v1468, %v1481
    %v1483 = vpop.f32.mrf.mxu0
    %v1484 = vadd.f32 %v1470, %v1483
    %1485 = vdwg.mxu0
    %1486 = vmatpush.bf16.msra.mxu0 0
    %1487 = vmatpush.bf16.msra.mxu0 0
    %1488 = vmatpush.bf16.msra.mxu0 0
    %1489 = vmatpush.bf16.msra.mxu0 0
    %1490 = vmatpush.bf16.msra.mxu0 0
    %1491 = vmatpush.bf16.msra.mxu0 0
    %1492 = vmatpush.bf16.msra.mxu0 0
    %1493 = vmatpush.bf16.msra.mxu0 %v1101
    %1494 = vmatmul.bf16.gmra.mxu0 %v1302
    %v1495 = vpop.f32.mrf.mxu0
    %v1496 = vadd.f32 %v1482, %v1495
    %v1497 = vpop.f32.mrf.mxu0
    %v1498 = vadd.f32 %v1484, %v1497
    %1499 = vdwg.mxu0
    %1500 = vmatpush.bf16.msra.mxu0 %v938
    %1501 = vmatpush.bf16.msra.mxu0 %v934
    %1502 = vmatpush.bf16.msra.mxu0 %v930
    %1503 = vmatpush.bf16.msra.mxu0 %v926
    %1504 = vmatpush.bf16.msra.mxu0 %v922
    %1505 = vmatpush.bf16.msra.mxu0 %v918
    %1506 = vmatpush.bf16.msra.mxu0 %v914
    %1507 = vmatpush.bf16.msra.mxu0 %v910
    %1508 = vmatmul.bf16.gmra.mxu0 %v307
    %v1509 = vpop.f32.mrf.mxu0
    %v1510 = vadd.f32 %v279, %v1509
    %v1511 = vpop.f32.mrf.mxu0
    %v1512 = vadd.f32 %v279, %v1511
    %1513 = vdwg.mxu0
    %1514 = vmatpush.bf16.msra.mxu0 %v970
    %1515 = vmatpush.bf16.msra.mxu0 %v966
    %1516 = vmatpush.bf16.msra.mxu0 %v962
    %1517 = vmatpush.bf16.msra.mxu0 %v958
    %1518 = vmatpush.bf16.msra.mxu0 %v954
    %1519 = vmatpush.bf16.msra.mxu0 %v950
    %1520 = vmatpush.bf16.msra.mxu0 %v946
    %1521 = vmatpush.bf16.msra.mxu0 %v942
    %1522 = vmatmul.bf16.gmra.mxu0 %v308
    %v1523 = vpop.f32.mrf.mxu0
    %v1524 = vadd.f32 %v1510, %v1523
    %v1525 = vpop.f32.mrf.mxu0
    %v1526 = vadd.f32 %v1512, %v1525
    %1527 = vdwg.mxu0
    %1528 = vmatpush.bf16.msra.mxu0 %v1002
    %1529 = vmatpush.bf16.msra.mxu0 %v998
    %1530 = vmatpush.bf16.msra.mxu0 %v994
    %1531 = vmatpush.bf16.msra.mxu0 %v990
    %1532 = vmatpush.bf16.msra.mxu0 %v986
    %1533 = vmatpush.bf16.msra.mxu0 %v982
    %1534 = vmatpush.bf16.msra.mxu0 %v978
    %1535 = vmatpush.bf16.msra.mxu0 %v974
    %1536 = vmatmul.bf16.gmra.mxu0 %v309
    %v1537 = vpop.f32.mrf.mxu0
    %v1538 = vadd.f32 %v1524, %v1537
    %v1539 = vpop.f32.mrf.mxu0
    %v1540 = vadd.f32 %v1526, %v1539
    %1541 = vdwg.mxu0
    %1542 = vmatpush.bf16.msra.mxu0 %v1034
    %1543 = vmatpush.bf16.msra.mxu0 %v1030
    %1544 = vmatpush.bf16.msra.mxu0 %v1026
    %1545 = vmatpush.bf16.msra.mxu0 %v1022
    %1546 = vmatpush.bf16.msra.mxu0 %v1018
    %1547 = vmatpush.bf16.msra.mxu0 %v1014
    %1548 = vmatpush.bf16.msra.mxu0 %v1010
    %1549 = vmatpush.bf16.msra.mxu0 %v1006
    %1550 = vmatmul.bf16.gmra.mxu0 %v310
    %v1551 = vpop.f32.mrf.mxu0
    %v1552 = vadd.f32 %v1538, %v1551
    %v1553 = vpop.f32.mrf.mxu0
    %v1554 = vadd.f32 %v1540, %v1553
    %1555 = vdwg.mxu0
    %1556 = vmatpush.bf16.msra.mxu0 %v1066
    %1557 = vmatpush.bf16.msra.mxu0 %v1062
    %1558 = vmatpush.bf16.msra.mxu0 %v1058
    %1559 = vmatpush.bf16.msra.mxu0 %v1054
    %1560 = vmatpush.bf16.msra.mxu0 %v1050
    %1561 = vmatpush.bf16.msra.mxu0 %v1046
    %1562 = vmatpush.bf16.msra.mxu0 %v1042
    %1563 = vmatpush.bf16.msra.mxu0 %v1038
    %1564 = vmatmul.bf16.gmra.mxu0 %v311
    %v1565 = vpop.f32.mrf.mxu0
    %v1566 = vadd.f32 %v1552, %v1565
    %v1567 = vpop.f32.mrf.mxu0
    %v1568 = vadd.f32 %v1554, %v1567
    %1569 = vdwg.mxu0
    %1570 = vmatpush.bf16.msra.mxu0 %v1098
    %1571 = vmatpush.bf16.msra.mxu0 %v1094
    %1572 = vmatpush.bf16.msra.mxu0 %v1090
    %1573 = vmatpush.bf16.msra.mxu0 %v1086
    %1574 = vmatpush.bf16.msra.mxu0 %v1082
    %1575 = vmatpush.bf16.msra.mxu0 %v1078
    %1576 = vmatpush.bf16.msra.mxu0 %v1074
    %1577 = vmatpush.bf16.msra.mxu0 %v1070
    %1578 = vmatmul.bf16.gmra.mxu0 %v312
    %v1579 = vpop.f32.mrf.mxu0
    %v1580 = vadd.f32 %v1566, %v1579
    %v1581 = vpop.f32.mrf.mxu0
    %v1582 = vadd.f32 %v1568, %v1581
    %1583 = vdwg.mxu0
    %1584 = vmatpush.bf16.msra.mxu0 0
    %1585 = vmatpush.bf16.msra.mxu0 0
    %1586 = vmatpush.bf16.msra.mxu0 0
    %1587 = vmatpush.bf16.msra.mxu0 0
    %1588 = vmatpush.bf16.msra.mxu0 0
    %1589 = vmatpush.bf16.msra.mxu0 0
    %1590 = vmatpush.bf16.msra.mxu0 0
    %1591 = vmatpush.bf16.msra.mxu0 %v1102
    %1592 = vmatmul.bf16.gmra.mxu0 %v1302
    %v1593 = vpop.f32.mrf.mxu0
    %v1594 = vadd.f32 %v1580, %v1593
    %v1595 = vpop.f32.mrf.mxu0
    %v1596 = vadd.f32 %v1582, %v1595
    %1597 = vdwg.mxu0
    %1598 = vmatpush.bf16.msra.mxu0 %v939
    %1599 = vmatpush.bf16.msra.mxu0 %v935
    %1600 = vmatpush.bf16.msra.mxu0 %v931
    %1601 = vmatpush.bf16.msra.mxu0 %v927
    %1602 = vmatpush.bf16.msra.mxu0 %v923
    %1603 = vmatpush.bf16.msra.mxu0 %v919
    %1604 = vmatpush.bf16.msra.mxu0 %v915
    %1605 = vmatpush.bf16.msra.mxu0 %v911
    %1606 = vmatmul.bf16.gmra.mxu0 %v307
    %v1607 = vpop.f32.mrf.mxu0
    %v1608 = vadd.f32 %v280, %v1607
    %v1609 = vpop.f32.mrf.mxu0
    %v1610 = vadd.f32 %v280, %v1609
    %1611 = vdwg.mxu0
    %1612 = vmatpush.bf16.msra.mxu0 %v971
    %1613 = vmatpush.bf16.msra.mxu0 %v967
    %1614 = vmatpush.bf16.msra.mxu0 %v963
    %1615 = vmatpush.bf16.msra.mxu0 %v959
    %1616 = vmatpush.bf16.msra.mxu0 %v955
    %1617 = vmatpush.bf16.msra.mxu0 %v951
    %1618 = vmatpush.bf16.msra.mxu0 %v947
    %1619 = vmatpush.bf16.msra.mxu0 %v943
    %1620 = vmatmul.bf16.gmra.mxu0 %v308
    %v1621 = vpop.f32.mrf.mxu0
    %v1622 = vadd.f32 %v1608, %v1621
    %v1623 = vpop.f32.mrf.mxu0
    %v1624 = vadd.f32 %v1610, %v1623
    %1625 = vdwg.mxu0
    %1626 = vmatpush.bf16.msra.mxu0 %v1003
    %1627 = vmatpush.bf16.msra.mxu0 %v999
    %1628 = vmatpush.bf16.msra.mxu0 %v995
    %1629 = vmatpush.bf16.msra.mxu0 %v991
    %1630 = vmatpush.bf16.msra.mxu0 %v987
    %1631 = vmatpush.bf16.msra.mxu0 %v983
    %1632 = vmatpush.bf16.msra.mxu0 %v979
    %1633 = vmatpush.bf16.msra.mxu0 %v975
    %1634 = vmatmul.bf16.gmra.mxu0 %v309
    %v1635 = vpop.f32.mrf.mxu0
    %v1636 = vadd.f32 %v1622, %v1635
    %v1637 = vpop.f32.mrf.mxu0
    %v1638 = vadd.f32 %v1624, %v1637
    %1639 = vdwg.mxu0
    %1640 = vmatpush.bf16.msra.mxu0 %v1035
    %1641 = vmatpush.bf16.msra.mxu0 %v1031
    %1642 = vmatpush.bf16.msra.mxu0 %v1027
    %1643 = vmatpush.bf16.msra.mxu0 %v1023
    %1644 = vmatpush.bf16.msra.mxu0 %v1019
    %1645 = vmatpush.bf16.msra.mxu0 %v1015
    %1646 = vmatpush.bf16.msra.mxu0 %v1011
    %1647 = vmatpush.bf16.msra.mxu0 %v1007
    %1648 = vmatmul.bf16.gmra.mxu0 %v310
    %v1649 = vpop.f32.mrf.mxu0
    %v1650 = vadd.f32 %v1636, %v1649
    %v1651 = vpop.f32.mrf.mxu0
    %v1652 = vadd.f32 %v1638, %v1651
    %1653 = vdwg.mxu0
    %1654 = vmatpush.bf16.msra.mxu0 %v1067
    %1655 = vmatpush.bf16.msra.mxu0 %v1063
    %1656 = vmatpush.bf16.msra.mxu0 %v1059
    %1657 = vmatpush.bf16.msra.mxu0 %v1055
    %1658 = vmatpush.bf16.msra.mxu0 %v1051
    %1659 = vmatpush.bf16.msra.mxu0 %v1047
    %1660 = vmatpush.bf16.msra.mxu0 %v1043
    %1661 = vmatpush.bf16.msra.mxu0 %v1039
    %1662 = vmatmul.bf16.gmra.mxu0 %v311
    %v1663 = vpop.f32.mrf.mxu0
    %v1664 = vadd.f32 %v1650, %v1663
    %v1665 = vpop.f32.mrf.mxu0
    %v1666 = vadd.f32 %v1652, %v1665
    %1667 = vdwg.mxu0
    %1668 = vmatpush.bf16.msra.mxu0 %v1099
    %1669 = vmatpush.bf16.msra.mxu0 %v1095
    %1670 = vmatpush.bf16.msra.mxu0 %v1091
    %1671 = vmatpush.bf16.msra.mxu0 %v1087
    %1672 = vmatpush.bf16.msra.mxu0 %v1083
    %1673 = vmatpush.bf16.msra.mxu0 %v1079
    %1674 = vmatpush.bf16.msra.mxu0 %v1075
    %1675 = vmatpush.bf16.msra.mxu0 %v1071
    %1676 = vmatmul.bf16.gmra.mxu0 %v312
    %v1677 = vpop.f32.mrf.mxu0
    %v1678 = vadd.f32 %v1664, %v1677
    %v1679 = vpop.f32.mrf.mxu0
    %v1680 = vadd.f32 %v1666, %v1679
    %1681 = vdwg.mxu0
    %1682 = vmatpush.bf16.msra.mxu0 0
    %1683 = vmatpush.bf16.msra.mxu0 0
    %1684 = vmatpush.bf16.msra.mxu0 0
    %1685 = vmatpush.bf16.msra.mxu0 0
    %1686 = vmatpush.bf16.msra.mxu0 0
    %1687 = vmatpush.bf16.msra.mxu0 0
    %1688 = vmatpush.bf16.msra.mxu0 0
    %1689 = vmatpush.bf16.msra.mxu0 %v1103
    %1690 = vmatmul.bf16.gmra.mxu0 %v1302
    %v1691 = vpop.f32.mrf.mxu0
    %v1692 = vadd.f32 %v1678, %v1691
    %v1693 = vpop.f32.mrf.mxu0
    %v1694 = vadd.f32 %v1680, %v1693
    %1695 = vdwg.mxu0
    %v1696 = vmax.f32 %v1398, 0.0
    %v1697 = vmax.f32 %v1496, 0.0
    %v1698 = vmax.f32 %v1594, 0.0
    %v1699 = vmax.f32 %v1692, 0.0
    %v1700 = vmax.f32 %v1400, 0.0
    %v1701 = vmax.f32 %v1498, 0.0
    %v1702 = vmax.f32 %v1596, 0.0
    %v1703 = vmax.f32 %v1694, 0.0
    %v1704 = vpack.c.bf16 %v1700, %v1696
    %v1705 = vpack.c.bf16 %v1701, %v1697
    %v1706 = vpack.c.bf16 %v1702, %v1698
    %v1707 = vpack.c.bf16 %v1703, %v1699
    %v1708 = vld [vmem:[%s3] sm:$0xff]
    %v1709 = vld [vmem:[%s3 + $0x8] sm:$0xff]
    %v1710 = vld [vmem:[%s3 + $0x10] sm:$0xff]
    %v1711 = vld [vmem:[%s3 + $0x18] sm:$0xff]
    %v1712 = vld [vmem:[%s3 + $0x20] sm:$0xff]
    %v1713 = vld [vmem:[%s3 + $0x28] sm:$0xff]
    %v1714 = vld [vmem:[%s3 + $0x30] sm:$0xff]
    %v1715 = vld [vmem:[%s3 + $0x38] sm:$0xff]
    %v1716 = vld [vmem:[%s3 + $0x40] sm:$0xff]
    %v1717 = vld [vmem:[%s3 + $0x48] sm:$0xff]
    %v1718 = vld [vmem:[%s3 + $0x50] sm:$0xff]
    %v1719 = vld [vmem:[%s3 + $0x58] sm:$0xff]
    %v1720 = vld [vmem:[%s3 + $0x60] sm:$0xff]
    %v1721 = vld [vmem:[%s3 + $0x68] sm:$0xff]
    %v1722 = vld [vmem:[%s3 + $0x70] sm:$0xff]
    %v1723 = vld [vmem:[%s3 + $0x78] sm:$0xff]
    %v1724 = vld [vmem:[%s3 + $0x80] sm:$0xff]
    %v1725 = vld [vmem:[%s3 + $0x88] sm:$0xff]
    %v1726 = vld [vmem:[%s3 + $0x90] sm:$0xff]
    %v1727 = vld [vmem:[%s3 + $0x98] sm:$0xff]
    %v1728 = vld [vmem:[%s3 + $0xa0] sm:$0xff]
    %v1729 = vld [vmem:[%s3 + $0xa8] sm:$0xff]
    %v1730 = vld [vmem:[%s3 + $0xb0] sm:$0xff]
    %v1731 = vld [vmem:[%s3 + $0xb8] sm:$0xff]
    %v1732 = vld [vmem:[%s3 + $0xc0] sm:$0xff]
    %v1733 = vld [vmem:[%s3 + $0xc8] sm:$0xff]
    %v1734 = vld [vmem:[%s3 + $0xd0] sm:$0xff]
    %v1735 = vld [vmem:[%s3 + $0xd8] sm:$0xff]
    %v1736 = vld [vmem:[%s3 + $0xe0] sm:$0xff]
    %v1737 = vld [vmem:[%s3 + $0xe8] sm:$0xff]
    %v1738 = vld [vmem:[%s3 + $0xf0] sm:$0xff]
    %v1739 = vld [vmem:[%s3 + $0xf8] sm:$0xff]
    %v1740 = vld [vmem:[%s3 + $0x100] sm:$0xff]
    %v1741 = vld [vmem:[%s3 + $0x108] sm:$0xff]
    %v1742 = vld [vmem:[%s3 + $0x110] sm:$0xff]
    %v1743 = vld [vmem:[%s3 + $0x118] sm:$0xff]
    %v1744 = vld [vmem:[%s3 + $0x120] sm:$0xff]
    %v1745 = vld [vmem:[%s3 + $0x128] sm:$0xff]
    %v1746 = vld [vmem:[%s3 + $0x130] sm:$0xff]
    %v1747 = vld [vmem:[%s3 + $0x138] sm:$0xff]
    %v1748 = vld [vmem:[%s3 + $0x140] sm:$0xff]
    %v1749 = vld [vmem:[%s3 + $0x148] sm:$0xff]
    %v1750 = vld [vmem:[%s3 + $0x150] sm:$0xff]
    %v1751 = vld [vmem:[%s3 + $0x158] sm:$0xff]
    %v1752 = vld [vmem:[%s3 + $0x160] sm:$0xff]
    %v1753 = vld [vmem:[%s3 + $0x168] sm:$0xff]
    %v1754 = vld [vmem:[%s3 + $0x170] sm:$0xff]
    %v1755 = vld [vmem:[%s3 + $0x178] sm:$0xff]
    %v1756 = vld [vmem:[%s3 + $0x180] sm:$0xff]
    %v1757 = vld [vmem:[%s3 + $0x188] sm:$0xff]
    %v1758 = vld [vmem:[%s3 + $0x190] sm:$0xff]
    %v1759 = vld [vmem:[%s3 + $0x198] sm:$0xff]
    %v1760 = vld [vmem:[%s3 + $0x1a0] sm:$0xff]
    %v1761 = vld [vmem:[%s3 + $0x1a8] sm:$0xff]
    %v1762 = vld [vmem:[%s3 + $0x1b0] sm:$0xff]
    %v1763 = vld [vmem:[%s3 + $0x1b8] sm:$0xff]
    %v1764 = vld [vmem:[%s3 + $0x1c0] sm:$0xff]
    %v1765 = vld [vmem:[%s3 + $0x1c8] sm:$0xff]
    %v1766 = vld [vmem:[%s3 + $0x1d0] sm:$0xff]
    %v1767 = vld [vmem:[%s3 + $0x1d8] sm:$0xff]
    %v1768 = vld [vmem:[%s3 + $0x1e0] sm:$0xff]
    %v1769 = vld [vmem:[%s3 + $0x1e8] sm:$0xff]
    %v1770 = vld [vmem:[%s3 + $0x1f0] sm:$0xff]
    %v1771 = vld [vmem:[%s3 + $0x1f8] sm:$0xff]
    %v1772 = vld [vmem:[%s4] sm:$0x3]
    %v1774 = vperm.slane %v1772, 0
    %v1775 = vperm.slane %v1772, 1
    %v1842 = vunpack.c.l.b16 %v1708
    %v1843 = vunpack.c.h.b16 %v1708
    %v1844 = vunpack.c.l.b16 %v1709
    %v1845 = vunpack.c.h.b16 %v1709
    %v1846 = vunpack.c.l.b16 %v1710
    %v1847 = vunpack.c.h.b16 %v1710
    %v1848 = vunpack.c.l.b16 %v1711
    %v1849 = vunpack.c.h.b16 %v1711
    %v1850 = vunpack.c.l.b16 %v1712
    %v1851 = vunpack.c.h.b16 %v1712
    %v1852 = vunpack.c.l.b16 %v1713
    %v1853 = vunpack.c.h.b16 %v1713
    %v1854 = vunpack.c.l.b16 %v1714
    %v1855 = vunpack.c.h.b16 %v1714
    %v1856 = vunpack.c.l.b16 %v1715
    %v1857 = vunpack.c.h.b16 %v1715
    %v1858 = vunpack.c.l.b16 %v1716
    %v1859 = vunpack.c.h.b16 %v1716
    %v1860 = vunpack.c.l.b16 %v1717
    %v1861 = vunpack.c.h.b16 %v1717
    %v1862 = vunpack.c.l.b16 %v1718
    %v1863 = vunpack.c.h.b16 %v1718
    %v1864 = vunpack.c.l.b16 %v1719
    %v1865 = vunpack.c.h.b16 %v1719
    %v1866 = vunpack.c.l.b16 %v1720
    %v1867 = vunpack.c.h.b16 %v1720
    %v1868 = vunpack.c.l.b16 %v1721
    %v1869 = vunpack.c.h.b16 %v1721
    %v1870 = vunpack.c.l.b16 %v1722
    %v1871 = vunpack.c.h.b16 %v1722
    %v1872 = vunpack.c.l.b16 %v1723
    %v1873 = vunpack.c.h.b16 %v1723
    %v1874 = vunpack.c.l.b16 %v1724
    %v1875 = vunpack.c.h.b16 %v1724
    %v1876 = vunpack.c.l.b16 %v1725
    %v1877 = vunpack.c.h.b16 %v1725
    %v1878 = vunpack.c.l.b16 %v1726
    %v1879 = vunpack.c.h.b16 %v1726
    %v1880 = vunpack.c.l.b16 %v1727
    %v1881 = vunpack.c.h.b16 %v1727
    %v1882 = vunpack.c.l.b16 %v1728
    %v1883 = vunpack.c.h.b16 %v1728
    %v1884 = vunpack.c.l.b16 %v1729
    %v1885 = vunpack.c.h.b16 %v1729
    %v1886 = vunpack.c.l.b16 %v1730
    %v1887 = vunpack.c.h.b16 %v1730
    %v1888 = vunpack.c.l.b16 %v1731
    %v1889 = vunpack.c.h.b16 %v1731
    %v1890 = vunpack.c.l.b16 %v1732
    %v1891 = vunpack.c.h.b16 %v1732
    %v1892 = vunpack.c.l.b16 %v1733
    %v1893 = vunpack.c.h.b16 %v1733
    %v1894 = vunpack.c.l.b16 %v1734
    %v1895 = vunpack.c.h.b16 %v1734
    %v1896 = vunpack.c.l.b16 %v1735
    %v1897 = vunpack.c.h.b16 %v1735
    %v1898 = vunpack.c.l.b16 %v1736
    %v1899 = vunpack.c.h.b16 %v1736
    %v1900 = vunpack.c.l.b16 %v1737
    %v1901 = vunpack.c.h.b16 %v1737
    %v1902 = vunpack.c.l.b16 %v1738
    %v1903 = vunpack.c.h.b16 %v1738
    %v1904 = vunpack.c.l.b16 %v1739
    %v1905 = vunpack.c.h.b16 %v1739
    %v1906 = vunpack.c.l.b16 %v1740
    %v1907 = vunpack.c.h.b16 %v1740
    %v1908 = vunpack.c.l.b16 %v1741
    %v1909 = vunpack.c.h.b16 %v1741
    %v1910 = vunpack.c.l.b16 %v1742
    %v1911 = vunpack.c.h.b16 %v1742
    %v1912 = vunpack.c.l.b16 %v1743
    %v1913 = vunpack.c.h.b16 %v1743
    %v1914 = vunpack.c.l.b16 %v1744
    %v1915 = vunpack.c.h.b16 %v1744
    %v1916 = vunpack.c.l.b16 %v1745
    %v1917 = vunpack.c.h.b16 %v1745
    %v1918 = vunpack.c.l.b16 %v1746
    %v1919 = vunpack.c.h.b16 %v1746
    %v1920 = vunpack.c.l.b16 %v1747
    %v1921 = vunpack.c.h.b16 %v1747
    %v1922 = vunpack.c.l.b16 %v1748
    %v1923 = vunpack.c.h.b16 %v1748
    %v1924 = vunpack.c.l.b16 %v1749
    %v1925 = vunpack.c.h.b16 %v1749
    %v1926 = vunpack.c.l.b16 %v1750
    %v1927 = vunpack.c.h.b16 %v1750
    %v1928 = vunpack.c.l.b16 %v1751
    %v1929 = vunpack.c.h.b16 %v1751
    %v1930 = vunpack.c.l.b16 %v1752
    %v1931 = vunpack.c.h.b16 %v1752
    %v1932 = vunpack.c.l.b16 %v1753
    %v1933 = vunpack.c.h.b16 %v1753
    %v1934 = vunpack.c.l.b16 %v1754
    %v1935 = vunpack.c.h.b16 %v1754
    %v1936 = vunpack.c.l.b16 %v1755
    %v1937 = vunpack.c.h.b16 %v1755
    %v1938 = vunpack.c.l.b16 %v1756
    %v1939 = vunpack.c.h.b16 %v1756
    %v1940 = vunpack.c.l.b16 %v1757
    %v1941 = vunpack.c.h.b16 %v1757
    %v1942 = vunpack.c.l.b16 %v1758
    %v1943 = vunpack.c.h.b16 %v1758
    %v1944 = vunpack.c.l.b16 %v1759
    %v1945 = vunpack.c.h.b16 %v1759
    %v1946 = vunpack.c.l.b16 %v1760
    %v1947 = vunpack.c.h.b16 %v1760
    %v1948 = vunpack.c.l.b16 %v1761
    %v1949 = vunpack.c.h.b16 %v1761
    %v1950 = vunpack.c.l.b16 %v1762
    %v1951 = vunpack.c.h.b16 %v1762
    %v1952 = vunpack.c.l.b16 %v1763
    %v1953 = vunpack.c.h.b16 %v1763
    %v1954 = vunpack.c.l.b16 %v1764
    %v1955 = vunpack.c.h.b16 %v1764
    %v1956 = vunpack.c.l.b16 %v1765
    %v1957 = vunpack.c.h.b16 %v1765
    %v1958 = vunpack.c.l.b16 %v1766
    %v1959 = vunpack.c.h.b16 %v1766
    %v1960 = vunpack.c.l.b16 %v1767
    %v1961 = vunpack.c.h.b16 %v1767
    %v1962 = vunpack.c.l.b16 %v1768
    %v1963 = vunpack.c.h.b16 %v1768
    %v1964 = vunpack.c.l.b16 %v1769
    %v1965 = vunpack.c.h.b16 %v1769
    %v1966 = vunpack.c.l.b16 %v1770
    %v1967 = vunpack.c.h.b16 %v1770
    %v1968 = vunpack.c.l.b16 %v1771
    %v1969 = vunpack.c.h.b16 %v1771
    %v1970 = vpack.c.b16 %v1844, %v1842
    %v1971 = vpack.c.b16 %v1845, %v1843
    %v1972 = vpack.c.b16 %v1848, %v1846
    %v1973 = vpack.c.b16 %v1849, %v1847
    %v1974 = vpack.c.b16 %v1852, %v1850
    %v1975 = vpack.c.b16 %v1853, %v1851
    %v1976 = vpack.c.b16 %v1856, %v1854
    %v1977 = vpack.c.b16 %v1857, %v1855
    %v1978 = vpack.c.b16 %v1860, %v1858
    %v1979 = vpack.c.b16 %v1861, %v1859
    %v1980 = vpack.c.b16 %v1864, %v1862
    %v1981 = vpack.c.b16 %v1865, %v1863
    %v1982 = vpack.c.b16 %v1868, %v1866
    %v1983 = vpack.c.b16 %v1869, %v1867
    %v1984 = vpack.c.b16 %v1872, %v1870
    %v1985 = vpack.c.b16 %v1873, %v1871
    %v1986 = vpack.c.b16 %v1876, %v1874
    %v1987 = vpack.c.b16 %v1877, %v1875
    %v1988 = vpack.c.b16 %v1880, %v1878
    %v1989 = vpack.c.b16 %v1881, %v1879
    %v1990 = vpack.c.b16 %v1884, %v1882
    %v1991 = vpack.c.b16 %v1885, %v1883
    %v1992 = vpack.c.b16 %v1888, %v1886
    %v1993 = vpack.c.b16 %v1889, %v1887
    %v1994 = vpack.c.b16 %v1892, %v1890
    %v1995 = vpack.c.b16 %v1893, %v1891
    %v1996 = vpack.c.b16 %v1896, %v1894
    %v1997 = vpack.c.b16 %v1897, %v1895
    %v1998 = vpack.c.b16 %v1900, %v1898
    %v1999 = vpack.c.b16 %v1901, %v1899
    %v2000 = vpack.c.b16 %v1904, %v1902
    %v2001 = vpack.c.b16 %v1905, %v1903
    %v2002 = vpack.c.b16 %v1908, %v1906
    %v2003 = vpack.c.b16 %v1909, %v1907
    %v2004 = vpack.c.b16 %v1912, %v1910
    %v2005 = vpack.c.b16 %v1913, %v1911
    %v2006 = vpack.c.b16 %v1916, %v1914
    %v2007 = vpack.c.b16 %v1917, %v1915
    %v2008 = vpack.c.b16 %v1920, %v1918
    %v2009 = vpack.c.b16 %v1921, %v1919
    %v2010 = vpack.c.b16 %v1924, %v1922
    %v2011 = vpack.c.b16 %v1925, %v1923
    %v2012 = vpack.c.b16 %v1928, %v1926
    %v2013 = vpack.c.b16 %v1929, %v1927
    %v2014 = vpack.c.b16 %v1932, %v1930
    %v2015 = vpack.c.b16 %v1933, %v1931
    %v2016 = vpack.c.b16 %v1936, %v1934
    %v2017 = vpack.c.b16 %v1937, %v1935
    %v2018 = vpack.c.b16 %v1940, %v1938
    %v2019 = vpack.c.b16 %v1941, %v1939
    %v2020 = vpack.c.b16 %v1944, %v1942
    %v2021 = vpack.c.b16 %v1945, %v1943
    %v2022 = vpack.c.b16 %v1948, %v1946
    %v2023 = vpack.c.b16 %v1949, %v1947
    %v2024 = vpack.c.b16 %v1952, %v1950
    %v2025 = vpack.c.b16 %v1953, %v1951
    %v2026 = vpack.c.b16 %v1956, %v1954
    %v2027 = vpack.c.b16 %v1957, %v1955
    %v2028 = vpack.c.b16 %v1960, %v1958
    %v2029 = vpack.c.b16 %v1961, %v1959
    %v2030 = vpack.c.b16 %v1964, %v1962
    %v2031 = vpack.c.b16 %v1965, %v1963
    %v2032 = vpack.c.b16 %v1968, %v1966
    %v2033 = vpack.c.b16 %v1969, %v1967
    %2098 = vmatpush.bf16.msra.mxu0 %v1984
    %2099 = vmatpush.bf16.msra.mxu0 %v1982
    %2100 = vmatpush.bf16.msra.mxu0 %v1980
    %2101 = vmatpush.bf16.msra.mxu0 %v1978
    %2102 = vmatpush.bf16.msra.mxu0 %v1976
    %2103 = vmatpush.bf16.msra.mxu0 %v1974
    %2104 = vmatpush.bf16.msra.mxu0 %v1972
    %2105 = vmatpush.bf16.msra.mxu0 %v1970
    %2106 = vmatmul.bf16.gmra.mxu0 %v1704
    %v2107 = vpop.f32.mrf.mxu0
    %v2108 = vadd.f32 %v1774, %v2107
    %v2109 = vpop.f32.mrf.mxu0
    %v2110 = vadd.f32 %v1774, %v2109
    %2111 = vdwg.mxu0
    %2112 = vmatpush.bf16.msra.mxu0 %v2000
    %2113 = vmatpush.bf16.msra.mxu0 %v1998
    %2114 = vmatpush.bf16.msra.mxu0 %v1996
    %2115 = vmatpush.bf16.msra.mxu0 %v1994
    %2116 = vmatpush.bf16.msra.mxu0 %v1992
    %2117 = vmatpush.bf16.msra.mxu0 %v1990
    %2118 = vmatpush.bf16.msra.mxu0 %v1988
    %2119 = vmatpush.bf16.msra.mxu0 %v1986
    %2120 = vmatmul.bf16.gmra.mxu0 %v1705
    %v2121 = vpop.f32.mrf.mxu0
    %v2122 = vadd.f32 %v2108, %v2121
    %v2123 = vpop.f32.mrf.mxu0
    %v2124 = vadd.f32 %v2110, %v2123
    %2125 = vdwg.mxu0
    %2126 = vmatpush.bf16.msra.mxu0 %v2016
    %2127 = vmatpush.bf16.msra.mxu0 %v2014
    %2128 = vmatpush.bf16.msra.mxu0 %v2012
    %2129 = vmatpush.bf16.msra.mxu0 %v2010
    %2130 = vmatpush.bf16.msra.mxu0 %v2008
    %2131 = vmatpush.bf16.msra.mxu0 %v2006
    %2132 = vmatpush.bf16.msra.mxu0 %v2004
    %2133 = vmatpush.bf16.msra.mxu0 %v2002
    %2134 = vmatmul.bf16.gmra.mxu0 %v1706
    %v2135 = vpop.f32.mrf.mxu0
    %v2136 = vadd.f32 %v2122, %v2135
    %v2137 = vpop.f32.mrf.mxu0
    %v2138 = vadd.f32 %v2124, %v2137
    %2139 = vdwg.mxu0
    %2140 = vmatpush.bf16.msra.mxu0 %v2032
    %2141 = vmatpush.bf16.msra.mxu0 %v2030
    %2142 = vmatpush.bf16.msra.mxu0 %v2028
    %2143 = vmatpush.bf16.msra.mxu0 %v2026
    %2144 = vmatpush.bf16.msra.mxu0 %v2024
    %2145 = vmatpush.bf16.msra.mxu0 %v2022
    %2146 = vmatpush.bf16.msra.mxu0 %v2020
    %2147 = vmatpush.bf16.msra.mxu0 %v2018
    %2148 = vmatmul.bf16.gmra.mxu0 %v1707
    %v2149 = vpop.f32.mrf.mxu0
    %v2150 = vadd.f32 %v2136, %v2149
    %v2151 = vpop.f32.mrf.mxu0
    %v2152 = vadd.f32 %v2138, %v2151
    %2153 = vdwg.mxu0
    %2154 = vmatpush.bf16.msra.mxu0 %v1985
    %2155 = vmatpush.bf16.msra.mxu0 %v1983
    %2156 = vmatpush.bf16.msra.mxu0 %v1981
    %2157 = vmatpush.bf16.msra.mxu0 %v1979
    %2158 = vmatpush.bf16.msra.mxu0 %v1977
    %2159 = vmatpush.bf16.msra.mxu0 %v1975
    %2160 = vmatpush.bf16.msra.mxu0 %v1973
    %2161 = vmatpush.bf16.msra.mxu0 %v1971
    %2162 = vmatmul.bf16.gmra.mxu0 %v1704
    %v2163 = vpop.f32.mrf.mxu0
    %v2164 = vadd.f32 %v1775, %v2163
    %v2165 = vpop.f32.mrf.mxu0
    %v2166 = vadd.f32 %v1775, %v2165
    %2167 = vdwg.mxu0
    %2168 = vmatpush.bf16.msra.mxu0 %v2001
    %2169 = vmatpush.bf16.msra.mxu0 %v1999
    %2170 = vmatpush.bf16.msra.mxu0 %v1997
    %2171 = vmatpush.bf16.msra.mxu0 %v1995
    %2172 = vmatpush.bf16.msra.mxu0 %v1993
    %2173 = vmatpush.bf16.msra.mxu0 %v1991
    %2174 = vmatpush.bf16.msra.mxu0 %v1989
    %2175 = vmatpush.bf16.msra.mxu0 %v1987
    %2176 = vmatmul.bf16.gmra.mxu0 %v1705
    %v2177 = vpop.f32.mrf.mxu0
    %v2178 = vadd.f32 %v2164, %v2177
    %v2179 = vpop.f32.mrf.mxu0
    %v2180 = vadd.f32 %v2166, %v2179
    %2181 = vdwg.mxu0
    %2182 = vmatpush.bf16.msra.mxu0 %v2017
    %2183 = vmatpush.bf16.msra.mxu0 %v2015
    %2184 = vmatpush.bf16.msra.mxu0 %v2013
    %2185 = vmatpush.bf16.msra.mxu0 %v2011
    %2186 = vmatpush.bf16.msra.mxu0 %v2009
    %2187 = vmatpush.bf16.msra.mxu0 %v2007
    %2188 = vmatpush.bf16.msra.mxu0 %v2005
    %2189 = vmatpush.bf16.msra.mxu0 %v2003
    %2190 = vmatmul.bf16.gmra.mxu0 %v1706
    %v2191 = vpop.f32.mrf.mxu0
    %v2192 = vadd.f32 %v2178, %v2191
    %v2193 = vpop.f32.mrf.mxu0
    %v2194 = vadd.f32 %v2180, %v2193
    %2195 = vdwg.mxu0
    %2196 = vmatpush.bf16.msra.mxu0 %v2033
    %2197 = vmatpush.bf16.msra.mxu0 %v2031
    %2198 = vmatpush.bf16.msra.mxu0 %v2029
    %2199 = vmatpush.bf16.msra.mxu0 %v2027
    %2200 = vmatpush.bf16.msra.mxu0 %v2025
    %2201 = vmatpush.bf16.msra.mxu0 %v2023
    %2202 = vmatpush.bf16.msra.mxu0 %v2021
    %2203 = vmatpush.bf16.msra.mxu0 %v2019
    %2204 = vmatmul.bf16.gmra.mxu0 %v1707
    %v2205 = vpop.f32.mrf.mxu0
    %v2206 = vadd.f32 %v2192, %v2205
    %v2207 = vpop.f32.mrf.mxu0
    %v2208 = vadd.f32 %v2194, %v2207
    %2209 = vdwg.mxu0
    %v2210 = vmax.f32 %v2150, 0.0
    %v2211 = vmax.f32 %v2206, 0.0
    %v2212 = vmax.f32 %v2152, 0.0
    %v2213 = vmax.f32 %v2208, 0.0
    %v2214 = vpack.c.bf16 %v2212, %v2210
    %v2215 = vpack.c.bf16 %v2213, %v2211
    %v2216 = vld [vmem:[%s5] sm:$0xf]
    %v2217 = vld [vmem:[%s5 + $0x4] sm:$0xf]
    %v2218 = vld [vmem:[%s5 + $0x8] sm:$0xf]
    %v2219 = vld [vmem:[%s5 + $0xc] sm:$0xf]
    %v2220 = vld [vmem:[%s5 + $0x10] sm:$0xf]
    %v2221 = vld [vmem:[%s5 + $0x14] sm:$0xf]
    %v2222 = vld [vmem:[%s5 + $0x18] sm:$0xf]
    %v2223 = vld [vmem:[%s5 + $0x1c] sm:$0xf]
    %v2224 = vld [vmem:[%s5 + $0x20] sm:$0xf]
    %v2225 = vld [vmem:[%s5 + $0x24] sm:$0xf]
    %v2226 = vld [vmem:[%s5 + $0x28] sm:$0xf]
    %v2227 = vld [vmem:[%s5 + $0x2c] sm:$0xf]
    %v2228 = vld [vmem:[%s5 + $0x30] sm:$0xf]
    %v2229 = vld [vmem:[%s5 + $0x34] sm:$0xf]
    %v2230 = vld [vmem:[%s5 + $0x38] sm:$0xf]
    %v2231 = vld [vmem:[%s5 + $0x3c] sm:$0xf]
    %v2232 = vld [vmem:[%s5 + $0x40] sm:$0xf]
    %v2233 = vld [vmem:[%s5 + $0x44] sm:$0xf]
    %v2234 = vld [vmem:[%s5 + $0x48] sm:$0xf]
    %v2235 = vld [vmem:[%s5 + $0x4c] sm:$0xf]
    %v2236 = vld [vmem:[%s5 + $0x50] sm:$0xf]
    %v2237 = vld [vmem:[%s5 + $0x54] sm:$0xf]
    %v2238 = vld [vmem:[%s5 + $0x58] sm:$0xf]
    %v2239 = vld [vmem:[%s5 + $0x5c] sm:$0xf]
    %v2240 = vld [vmem:[%s5 + $0x60] sm:$0xf]
    %v2241 = vld [vmem:[%s5 + $0x64] sm:$0xf]
    %v2242 = vld [vmem:[%s5 + $0x68] sm:$0xf]
    %v2243 = vld [vmem:[%s5 + $0x6c] sm:$0xf]
    %v2244 = vld [vmem:[%s5 + $0x70] sm:$0xf]
    %v2245 = vld [vmem:[%s5 + $0x74] sm:$0xf]
    %v2246 = vld [vmem:[%s5 + $0x78] sm:$0xf]
    %v2247 = vld [vmem:[%s5 + $0x7c] sm:$0xf]
    %v2248 = vld [vmem:[%s6] sm:$0x1]
    %v2250 = vperm.slane %v2248, 0
    %v2284 = vunpack.c.l.b16 %v2216
    %v2285 = vunpack.c.l.b16 %v2217
    %v2286 = vunpack.c.l.b16 %v2218
    %v2287 = vunpack.c.l.b16 %v2219
    %v2288 = vunpack.c.l.b16 %v2220
    %v2289 = vunpack.c.l.b16 %v2221
    %v2290 = vunpack.c.l.b16 %v2222
    %v2291 = vunpack.c.l.b16 %v2223
    %v2292 = vunpack.c.l.b16 %v2224
    %v2293 = vunpack.c.l.b16 %v2225
    %v2294 = vunpack.c.l.b16 %v2226
    %v2295 = vunpack.c.l.b16 %v2227
    %v2296 = vunpack.c.l.b16 %v2228
    %v2297 = vunpack.c.l.b16 %v2229
    %v2298 = vunpack.c.l.b16 %v2230
    %v2299 = vunpack.c.l.b16 %v2231
    %v2300 = vunpack.c.l.b16 %v2232
    %v2301 = vunpack.c.l.b16 %v2233
    %v2302 = vunpack.c.l.b16 %v2234
    %v2303 = vunpack.c.l.b16 %v2235
    %v2304 = vunpack.c.l.b16 %v2236
    %v2305 = vunpack.c.l.b16 %v2237
    %v2306 = vunpack.c.l.b16 %v2238
    %v2307 = vunpack.c.l.b16 %v2239
    %v2308 = vunpack.c.l.b16 %v2240
    %v2309 = vunpack.c.l.b16 %v2241
    %v2310 = vunpack.c.l.b16 %v2242
    %v2311 = vunpack.c.l.b16 %v2243
    %v2312 = vunpack.c.l.b16 %v2244
    %v2313 = vunpack.c.l.b16 %v2245
    %v2314 = vunpack.c.l.b16 %v2246
    %v2315 = vunpack.c.l.b16 %v2247
    %v2316 = vpack.c.b16 %v2285, %v2284
    %v2317 = vpack.c.b16 %v2287, %v2286
    %v2318 = vpack.c.b16 %v2289, %v2288
    %v2319 = vpack.c.b16 %v2291, %v2290
    %v2320 = vpack.c.b16 %v2293, %v2292
    %v2321 = vpack.c.b16 %v2295, %v2294
    %v2322 = vpack.c.b16 %v2297, %v2296
    %v2323 = vpack.c.b16 %v2299, %v2298
    %v2324 = vpack.c.b16 %v2301, %v2300
    %v2325 = vpack.c.b16 %v2303, %v2302
    %v2326 = vpack.c.b16 %v2305, %v2304
    %v2327 = vpack.c.b16 %v2307, %v2306
    %v2328 = vpack.c.b16 %v2309, %v2308
    %v2329 = vpack.c.b16 %v2311, %v2310
    %v2330 = vpack.c.b16 %v2313, %v2312
    %v2331 = vpack.c.b16 %v2315, %v2314
    %2348 = vmatpush.bf16.msra.mxu0 %v2323
    %2349 = vmatpush.bf16.msra.mxu0 %v2322
    %2350 = vmatpush.bf16.msra.mxu0 %v2321
    %2351 = vmatpush.bf16.msra.mxu0 %v2320
    %2352 = vmatpush.bf16.msra.mxu0 %v2319
    %2353 = vmatpush.bf16.msra.mxu0 %v2318
    %2354 = vmatpush.bf16.msra.mxu0 %v2317
    %2355 = vmatpush.bf16.msra.mxu0 %v2316
    %2356 = vmatmul.bf16.gmra.mxu0 %v2214
    %v2357 = vpop.f32.mrf.mxu0
    %v2358 = vadd.f32 %v2250, %v2357
    %v2359 = vpop.f32.mrf.mxu0
    %v2360 = vadd.f32 %v2250, %v2359
    %2361 = vdwg.mxu0
    %2362 = vmatpush.bf16.msra.mxu0 %v2331
    %2363 = vmatpush.bf16.msra.mxu0 %v2330
    %2364 = vmatpush.bf16.msra.mxu0 %v2329
    %2365 = vmatpush.bf16.msra.mxu0 %v2328
    %2366 = vmatpush.bf16.msra.mxu0 %v2327
    %2367 = vmatpush.bf16.msra.mxu0 %v2326
    %2368 = vmatpush.bf16.msra.mxu0 %v2325
    %2369 = vmatpush.bf16.msra.mxu0 %v2324
    %2370 = vmatmul.bf16.gmra.mxu0 %v2215
    %v2371 = vpop.f32.mrf.mxu0
    %v2372 = vadd.f32 %v2358, %v2371
    %v2373 = vpop.f32.mrf.mxu0
    %v2374 = vadd.f32 %v2360, %v2373
    %2375 = vdwg.mxu0
    %v2376 = vmax.f32 %v2372, 0.0
    %v2377 = vmax.f32 %v2374, 0.0
    %v2378 = vpack.c.bf16 %v2377, %v2376
    %v2379 = vld [vmem:[%s7] sm:$0xf]
    %v2380 = vld [vmem:[%s7 + $0x4] sm:$0xf]
    %v2381 = vld [vmem:[%s7 + $0x8] sm:$0xf]
    %v2382 = vld [vmem:[%s7 + $0xc] sm:$0xf]
    %v2383 = vld [vmem:[%s7 + $0x10] sm:$0xf]
    %v2384 = vld [vmem:[%s7 + $0x14] sm:$0xf]
    %v2385 = vld [vmem:[%s7 + $0x18] sm:$0xf]
    %v2386 = vld [vmem:[%s7 + $0x1c] sm:$0xf]
    %v2387 = vld [vmem:[%s7 + $0x20] sm:$0xf]
    %v2388 = vld [vmem:[%s7 + $0x24] sm:$0xf]
    %v2389 = vld [vmem:[%s7 + $0x28] sm:$0xf]
    %v2390 = vld [vmem:[%s7 + $0x2c] sm:$0xf]
    %v2391 = vld [vmem:[%s7 + $0x30] sm:$0xf]
    %v2392 = vld [vmem:[%s7 + $0x34] sm:$0xf]
    %v2393 = vld [vmem:[%s7 + $0x38] sm:$0xf]
    %v2394 = vld [vmem:[%s7 + $0x3c] sm:$0xf]
    %v2395 = vld [vmem:[%s8] sm:$0x1]
    %v2397 = vperm.slane %v2395, 0
    %v2415 = vunpack.c.l.b16 %v2379
    %v2416 = vunpack.c.l.b16 %v2380
    %v2417 = vunpack.c.l.b16 %v2381
    %v2418 = vunpack.c.l.b16 %v2382
    %v2419 = vunpack.c.l.b16 %v2383
    %v2420 = vunpack.c.l.b16 %v2384
    %v2421 = vunpack.c.l.b16 %v2385
    %v2422 = vunpack.c.l.b16 %v2386
    %v2423 = vunpack.c.l.b16 %v2387
    %v2424 = vunpack.c.l.b16 %v2388
    %v2425 = vunpack.c.l.b16 %v2389
    %v2426 = vunpack.c.l.b16 %v2390
    %v2427 = vunpack.c.l.b16 %v2391
    %v2428 = vunpack.c.l.b16 %v2392
    %v2429 = vunpack.c.l.b16 %v2393
    %v2430 = vunpack.c.l.b16 %v2394
    %v2431 = vpack.c.b16 %v2416, %v2415
    %v2432 = vpack.c.b16 %v2418, %v2417
    %v2433 = vpack.c.b16 %v2420, %v2419
    %v2434 = vpack.c.b16 %v2422, %v2421
    %v2435 = vpack.c.b16 %v2424, %v2423
    %v2436 = vpack.c.b16 %v2426, %v2425
    %v2437 = vpack.c.b16 %v2428, %v2427
    %v2438 = vpack.c.b16 %v2430, %v2429
    %2447 = vmatpush.bf16.msra.mxu0 %v2438
    %2448 = vmatpush.bf16.msra.mxu0 %v2437
    %2449 = vmatpush.bf16.msra.mxu0 %v2436
    %2450 = vmatpush.bf16.msra.mxu0 %v2435
    %2451 = vmatpush.bf16.msra.mxu0 %v2434
    %2452 = vmatpush.bf16.msra.mxu0 %v2433
    %2453 = vmatpush.bf16.msra.mxu0 %v2432
    %2454 = vmatpush.bf16.msra.mxu0 %v2431
    %2455 = vmatmul.bf16.gmra.mxu0 %v2378
    %v2456 = vpop.f32.mrf.mxu0
    %v2457 = vadd.f32 %v2397, %v2456
    %v2458 = vpop.f32.mrf.mxu0
    %v2459 = vadd.f32 %v2397, %v2458
    %2460 = vdwg.mxu0
    %v2461 = vmax.f32 %v2457, 0.0
    %v2462 = vmax.f32 %v2459, 0.0
    %v2463 = vpack.c.bf16 %v2462, %v2461
    %v2464 = vld [vmem:[#allocation4] sm:$0xf]
    %v2465 = vld [vmem:[#allocation4 + $0x4] sm:$0xf]
    %v2466 = vld [vmem:[#allocation4 + $0x8] sm:$0xf]
    %v2467 = vld [vmem:[#allocation4 + $0xc] sm:$0xf]
    %v2468 = vld [vmem:[#allocation4 + $0x10] sm:$0xf]
    %v2469 = vld [vmem:[#allocation4 + $0x14] sm:$0xf]
    %v2470 = vld [vmem:[#allocation4 + $0x18] sm:$0xf]
    %v2471 = vld [vmem:[#allocation4 + $0x1c] sm:$0xf]
    %v2472 = vld [vmem:[%s10] sm:$0x1]
    %v2474 = vperm.slane %v2472, 0
    %v2484 = vunpack.c.l.b16 %v2464
    %v2485 = vunpack.c.l.b16 %v2465
    %v2486 = vunpack.c.l.b16 %v2466
    %v2487 = vunpack.c.l.b16 %v2467
    %v2488 = vunpack.c.l.b16 %v2468
    %v2489 = vunpack.c.l.b16 %v2469
    %v2490 = vunpack.c.l.b16 %v2470
    %v2491 = vunpack.c.l.b16 %v2471
    %v2492 = vpack.c.b16 %v2485, %v2484
    %v2493 = vpack.c.b16 %v2487, %v2486
    %v2494 = vpack.c.b16 %v2489, %v2488
    %v2495 = vpack.c.b16 %v2491, %v2490
    %vm2500 = vcmask 523264
    %v2502 = vsel %vm2500, %v2463, 0
    %2504 = vmatpush.bf16.msra.mxu0 0
    %2505 = vmatpush.bf16.msra.mxu0 0
    %2506 = vmatpush.bf16.msra.mxu0 0
    %2507 = vmatpush.bf16.msra.mxu0 0
    %2508 = vmatpush.bf16.msra.mxu0 %v2495
    %2509 = vmatpush.bf16.msra.mxu0 %v2494
    %2510 = vmatpush.bf16.msra.mxu0 %v2493
    %2511 = vmatpush.bf16.msra.mxu0 %v2492
    %2512 = vmatmul.bf16.gmra.mxu0 %v2502
    %v2513 = vpop.f32.mrf.mxu0
    %v2514 = vadd.f32 %v2474, %v2513
    %v2515 = vpop.f32.mrf.mxu0
    %v2516 = vadd.f32 %v2474, %v2515
    %2517 = vdwg.mxu0
    %v2518 = vpack.c.bf16 %v2514, %v2514
    %v2519 = vpack.c.bf16 %v2516, %v2516
    %2520 = vst [vmem:[%s11] sm:$0xf] %v2518
    %2521 = vst [vmem:[%s11 + $0x4] sm:$0xf] %v2519
    // Predicated region
    $region54: #{net_forward.1} parent=1 // pred_check
      _
    $region55: #{net_forward.1} parent=1 // pred_check_branch
      %2523 = sbr.rel (0) target = $region57
    $region56: #{net_forward.1} parent=1 // pred_region
      _
    $region57: #{net_forward.1} parent=1 // pred_fallthru
      _
    // Predicated region
    $region58: #{net_forward.1} parent=1 // pred_check
      _
    $region59: #{net_forward.1} parent=1 // pred_check_branch
      %2525 = sbr.rel (0) target = $region61
    $region60: #{net_forward.1} parent=1 // pred_region
      _
    $region61: #{net_forward.1} parent=1 // pred_fallthru
      _
    %2526 = vsyncpa [#allocation3], 1
    %2527 = vsyncpa [#allocation5], 1

</llo_original>
